<compile_context>
chip_gen: v7x
topology: tpu7x:2x2x1
jax: 0.10.0
libtpu: 0.0.40
codegen_flags: <defaults>
</compile_context>

<pallas_src>
import math

import jax
import jax.numpy as jnp
from jax.experimental import pallas as pl
from jax.experimental.pallas import tpu as pltpu

# ----------------------------- config ---------------------------------------
BATCH = 2
EMB_DIM = 32
TEXT_DIM = 48
IMAGE_DIM = 64
NUM_HEADS = 4
SEQ = 4                       # 4 modality tokens (user, item, text, image)
HEAD_DIM = EMB_DIM // NUM_HEADS
LN_EPS = 1e-5
FEAT_DIM = 2 * EMB_DIM + TEXT_DIM + IMAGE_DIM      # 176 packed feature cols
IN_DIM = FEAT_DIM + SEQ                            # + one-hot bias selector


# ----------------------------- kernel ---------------------------------------
def fusion_kernel(x_ref, waug_ref, wqkv_ref, wo1_ref, w2_ref, vec_ref, out_ref):
    R = x_ref.shape[0]            # S * B_blk rows, modality-major within block
    E = waug_ref.shape[1]
    Bblk = R // SEQ
    H = NUM_HEADS
    Dh = E // H

    vecs = vec_ref[...]           # [6, 3E] packed small vectors
    b_qkv = vecs[0:1, 0:3 * E]
    b_o = vecs[1:2, 0:E]
    ln_g = vecs[2:3, 0:E]
    ln_b = vecs[3:4, 0:E]
    b_1 = vecs[4:5, 0:2 * E]
    b_2 = vecs[5:6, 0:E]

    def layer_norm(x):
        mu = jnp.mean(x, axis=-1, keepdims=True)
        var = jnp.mean((x - mu) ** 2, axis=-1, keepdims=True)
        return (x - mu) * jax.lax.rsqrt(var + LN_EPS) * ln_g + ln_b

    # ---- fused block-diagonal modality projection (biases via one-hot cols) --
    feats = jnp.dot(x_ref[...], waug_ref[...],
                    preferred_element_type=jnp.float32)            # [R, E]

    # ---- fused QKV projection (1/sqrt(head_dim) folded into Q weights/bias) --
    qkv = jnp.dot(feats, wqkv_ref[...],
                  preferred_element_type=jnp.float32) + b_qkv      # [R, 3E]
    q = qkv[:, 0:E]
    k = qkv[:, E:2 * E]
    v = qkv[:, 2 * E:3 * E]

    # ---- block-diagonal batch mask (modality-major rows: r = s*Bblk + b) -----
    ri = jax.lax.broadcasted_iota(jnp.int32, (R, R), 0)
    ci = jax.lax.broadcasted_iota(jnp.int32, (R, R), 1)
    if (Bblk & (Bblk - 1)) == 0:       # power-of-two block: cheap bitwise mod
        same_batch = jnp.bitwise_and(ri, Bblk - 1) == jnp.bitwise_and(ci, Bblk - 1)
    else:
        same_batch = (ri % Bblk) == (ci % Bblk)
    neg_big = jnp.float32(-1e30)

    wo1 = wo1_ref[...]                 # [E, 3E] = [W_o | W_ffn1]

    # ---- multi-head self-attention (eval mode), all block batches at once ----
    # Per-head outputs are lane-concatenated and W_o applied ONCE (hoisted out
    # of the head loop -> single MXU round trip instead of 4).
    o_heads = []
    for h in range(H):                 # H=4 static unroll
        lo, hi = h * Dh, (h + 1) * Dh
        qh = q[:, lo:hi]
        kh = k[:, lo:hi]
        vh = v[:, lo:hi]
        s = jax.lax.dot_general(qh, kh, (((1,), (1,)), ((), ())),
                                preferred_element_type=jnp.float32)   # [R, R]
        s = jnp.where(same_batch, s, neg_big)
        m = jnp.max(s, axis=-1, keepdims=True)
        p = jnp.exp(s - m)
        p = p / jnp.sum(p, axis=-1, keepdims=True)       # exact softmax denom
        o_heads.append(jnp.dot(p, vh, preferred_element_type=jnp.float32))
    o_cat = jnp.concatenate(o_heads, axis=1)                          # [R, E]
    attn_out = jnp.dot(o_cat, wo1[:, 0:E],
                       preferred_element_type=jnp.float32) + b_o

    # ---- add & norm ----------------------------------------------------------
    x1 = layer_norm(feats + attn_out)

    # ---- FFN (dropout = identity in eval) ------------------------------------
    h1 = jnp.maximum(
        jnp.dot(x1, wo1[:, E:3 * E], preferred_element_type=jnp.float32) + b_1,
        0.0)                                                          # [R, 2E]
    ffn_out = jnp.dot(h1, w2_ref[...],
                      preferred_element_type=jnp.float32) + b_2       # [R, E]

    # ---- add & norm (same LayerNorm params, as in the PyTorch module) --------
    x2 = layer_norm(x1 + ffn_out)

    # ---- mean over the 4 modality tokens: contiguous-slice adds --------------
    out_ref[...] = (x2[0:Bblk] + x2[Bblk:2 * Bblk] + x2[2 * Bblk:3 * Bblk]
                    + x2[3 * Bblk:4 * Bblk]) * (1.0 / SEQ)


# ----------------------------- one-time weight packing -----------------------
def pack_params(params):
    """Fold module parameters into the kernel's packed operands. Call ONCE."""
    (wu, bu, wi, bi, wt, bt, wg, bg,
     wq, bq, wk, bk, wv, bv, wo, bo,
     ln_g, ln_b, w1, b1, w2, b2) = params
    E = EMB_DIM
    scale = 1.0 / math.sqrt(HEAD_DIM)

    w_aug = jnp.concatenate([wu, wi, wt, wg, bu, bi, bt, bg], axis=0)  # [180,E]
    w_qkv = jnp.concatenate([wq * scale, wk, wv], axis=1)              # [E, 3E]
    b_qkv = jnp.concatenate([bq * scale, bk, bv], axis=1)              # [1, 3E]
    w_o1 = jnp.concatenate([wo, w1], axis=1)                           # [E, 3E]

    def pad_lanes(a):
        return jnp.pad(a, ((0, 0), (0, 3 * E - a.shape[1])))
    vecs = jnp.concatenate(
        [pad_lanes(v) for v in (b_qkv, bo, ln_g, ln_b, b1, b2)], axis=0)  # [6,3E]

    return dict(w_aug=w_aug, w_qkv=w_qkv, w_o1=w_o1, w2=w2, vecs=vecs)


# ----------------------------- wrapper ---------------------------------------
def _pick_batch_block(B):
    if B <= 64:
        return B                         # single grid step, full-dim blocks
    for cand in (128, 64, 32, 16, 8):    # multiples of 8 keep sublane tiling
        if B % cand == 0:
            return cand
    return B


def _build_x_aug(user, item, text, image, b_blk):
    """Activation slab: per-row modality features + one-hot bias selector.

    Rows are modality-major *within* each batch block (r = s*b_blk + b) so the
    kernel's final mean is a contiguous-slice add; blocks are stacked so a
    rectangular row BlockSpec tiles them.
    """
    B = user.shape[0]

    def pad_cols(a, lo, hi):
        return jnp.pad(a, ((0, 0), (lo, FEAT_DIM - hi)))

    off = (0, EMB_DIM, 2 * EMB_DIM, 2 * EMB_DIM + TEXT_DIM, FEAT_DIM)
    feat = jnp.stack([pad_cols(user, off[0], off[1]),
                      pad_cols(item, off[1], off[2]),
                      pad_cols(text, off[2], off[3]),
                      pad_cols(image, off[3], off[4])], axis=1)     # [B, S, 176]
    onehot = jnp.broadcast_to(jnp.eye(SEQ, dtype=feat.dtype), (B, SEQ, SEQ))
    x = jnp.concatenate([feat, onehot], axis=-1)                     # [B, S, 180]

    G = B // b_blk
    return (x.reshape(G, b_blk, SEQ, IN_DIM)
             .transpose(0, 2, 1, 3)
             .reshape(G * SEQ * b_blk, IN_DIM))


def multimodal_fusion(inputs, packed, b_blk=None):
    user, item, text, image = inputs
    B = user.shape[0]
    E = EMB_DIM
    if b_blk is None:
        b_blk = _pick_batch_block(B)
    assert B % b_blk == 0
    G = B // b_blk
    R_blk = SEQ * b_blk

    x_aug = _build_x_aug(user, item, text, image, b_blk)

    # NOTE: if R_blk is scaled up, respect the scoped-VMEM defaults
    # (v5e 16 MiB / v6e 32 MiB / v7x 32 MiB of 64 MiB physical) or set
    # vmem_limit_bytes explicitly in CompilerParams.
    return pl.pallas_call(
        fusion_kernel,
        out_shape=jax.ShapeDtypeStruct((B, E), jnp.float32),
        grid=(G,),
        in_specs=[
            pl.BlockSpec((R_blk, IN_DIM), lambda g: (g, 0)),
            pl.BlockSpec((IN_DIM, E), lambda g: (0, 0)),
            pl.BlockSpec((E, 3 * E), lambda g: (0, 0)),
            pl.BlockSpec((E, 3 * E), lambda g: (0, 0)),
            pl.BlockSpec((2 * E, E), lambda g: (0, 0)),
            pl.BlockSpec((6, 3 * E), lambda g: (0, 0)),
        ],
        out_specs=pl.BlockSpec((b_blk, E), lambda g: (g, 0)),
        compiler_params=pltpu.CompilerParams(
            dimension_semantics=("parallel",)),   # shards batch blocks on v7x
    )(x_aug, packed["w_aug"], packed["w_qkv"], packed["w_o1"],
      packed["w2"], packed["vecs"])


# ----------------------------- reference (plain JAX) --------------------------
def reference(inputs, params):
    (user, item, text, image) = inputs
    (wu, bu, wi, bi, wt, bt, wg, bg,
     wq, bq, wk, bk, wv, bv, wo, bo,
     ln_g, ln_b, w1, b1, w2, b2) = params

    hi = jax.lax.Precision.HIGHEST

    def lin(x, w, b):
        return jnp.dot(x, w, precision=hi) + b

    def ln(x):
        mu = jnp.mean(x, axis=-1, keepdims=True)
        var = jnp.mean((x - mu) ** 2, axis=-1, keepdims=True)
        return (x - mu) / jnp.sqrt(var + LN_EPS) * ln_g + ln_b

    feats = jnp.stack(
        [lin(user, wu, bu), lin(item, wi, bi),
         lin(text, wt, bt), lin(image, wg, bg)], axis=1)       # [B, S, E]
    B, S, E = feats.shape
    q = (lin(feats, wq, bq)).reshape(B, S, NUM_HEADS, HEAD_DIM)
    k = (lin(feats, wk, bk)).reshape(B, S, NUM_HEADS, HEAD_DIM)
    v = (lin(feats, wv, bv)).reshape(B, S, NUM_HEADS, HEAD_DIM)
    scores = jnp.einsum('bqhd,bkhd->bhqk', q, k, precision=hi) / math.sqrt(HEAD_DIM)
    p = jax.nn.softmax(scores, axis=-1)
    o = jnp.einsum('bhqk,bkhd->bqhd', p, v, precision=hi).reshape(B, S, E)
    attn_out = lin(o, wo, bo)
    x1 = ln(feats + attn_out)
    ffn = lin(jnp.maximum(lin(x1, w1, b1), 0.0), w2, b2)
    x2 = ln(x1 + ffn)
    return jnp.mean(x2, axis=1)


# ----------------------------- main ------------------------------------------
if __name__ == "__main__":
    key = jax.random.PRNGKey(0)
    k_in, k_par = jax.random.split(key)

    # inputs
    ki = jax.random.split(k_in, 4)
    user = jax.random.normal(ki[0], (BATCH, EMB_DIM), jnp.float32)
    item = jax.random.normal(ki[1], (BATCH, EMB_DIM), jnp.float32)
    text = jax.random.normal(ki[2], (BATCH, TEXT_DIM), jnp.float32)
    image = jax.random.normal(ki[3], (BATCH, IMAGE_DIM), jnp.float32)
    inputs = (user, item, text, image)

    # deterministic parameters (weights stored input-major: y = x @ W + b)
    kp = jax.random.split(k_par, 16)

    def w(kk, shape, scale=0.05):
        return scale * jax.random.normal(kk, shape, jnp.float32)

    def b2d(kk, dim, scale=0.02):
        return scale * jax.random.normal(kk, (1, dim), jnp.float32)

    params = (
        w(kp[0], (EMB_DIM, EMB_DIM)),   b2d(kp[1], EMB_DIM),      # user_proj
        w(kp[2], (EMB_DIM, EMB_DIM)),   b2d(kp[3], EMB_DIM),      # item_proj
        w(kp[4], (TEXT_DIM, EMB_DIM)),  b2d(kp[5], EMB_DIM),      # text_proj
        w(kp[6], (IMAGE_DIM, EMB_DIM)), b2d(kp[7], EMB_DIM),      # image_proj
        w(kp[8], (EMB_DIM, EMB_DIM)),   b2d(kp[9], EMB_DIM),      # Wq, bq
        w(kp[10], (EMB_DIM, EMB_DIM)),  b2d(kp[11], EMB_DIM),     # Wk, bk
        w(kp[12], (EMB_DIM, EMB_DIM)),  b2d(kp[13], EMB_DIM),     # Wv, bv
        w(kp[14], (EMB_DIM, EMB_DIM)),  b2d(kp[15], EMB_DIM),     # Wo, bo
        jnp.ones((1, EMB_DIM), jnp.float32),                      # LN gamma
        jnp.zeros((1, EMB_DIM), jnp.float32),                     # LN beta
        w(kp[0], (EMB_DIM, 2 * EMB_DIM)), b2d(kp[1], 2 * EMB_DIM),  # FFN W1,b1
        w(kp[2], (2 * EMB_DIM, EMB_DIM)), b2d(kp[3], EMB_DIM),      # FFN W2,b2
    )

    # one-time weight packing (amortized across all calls), then a jitted
    # forward so the per-call activation packing fuses with the pallas_call.
    packed = jax.block_until_ready(
        jax.tree_util.tree_map(jnp.asarray, pack_params(params)))

    @jax.jit
    def forward(u, it, tx, im):
        return multimodal_fusion((u, it, tx, im), packed)

    out = jax.block_until_ready(forward(*inputs))

    ref = jax.block_until_ready(reference(inputs, params))
    assert out.shape == (BATCH, EMB_DIM)
    # tolerance: kernel matmuls use the MXU default f32 path, reference uses
    # Precision.HIGHEST (softmax denominator is now an exact divide)
    assert jnp.allclose(out, ref, rtol=2e-3, atol=2e-3), (
        f"max abs err {jnp.max(jnp.abs(out - ref))}")

    print("KERNEL_OK")
</pallas_src>

<mosaic_0001>
module attributes {stable_mosaic.version = 11 : i64} {
  func.func @fusion_kernel(%arg0: i32, %arg1: memref<8x180xf32, #tpu.memory_space<vmem>>, %arg2: memref<180x32xf32, #tpu.memory_space<vmem>>, %arg3: memref<32x96xf32, #tpu.memory_space<vmem>>, %arg4: memref<32x96xf32, #tpu.memory_space<vmem>>, %arg5: memref<64x32xf32, #tpu.memory_space<vmem>>, %arg6: memref<6x96xf32, #tpu.memory_space<vmem>>, %arg7: memref<2x32xf32, #tpu.memory_space<vmem>>) attributes {dimension_semantics = [#tpu.dimension_semantics<parallel>], iteration_bounds = array<i64: 1>, scalar_prefetch = 0 : i64, scratch_operands = 0 : i64, tpu.core_type = #tpu.core_type<tc>, window_params = [{transform_indices = @transform_0, window_bounds = array<i64: 8, 180>}, {pipeline_mode = #tpu.pipeline_mode<synchronous>, transform_indices = @transform_1, window_bounds = array<i64: 180, 32>}, {pipeline_mode = #tpu.pipeline_mode<synchronous>, transform_indices = @transform_2, window_bounds = array<i64: 32, 96>}, {pipeline_mode = #tpu.pipeline_mode<synchronous>, transform_indices = @transform_3, window_bounds = array<i64: 32, 96>}, {pipeline_mode = #tpu.pipeline_mode<synchronous>, transform_indices = @transform_4, window_bounds = array<i64: 64, 32>}, {pipeline_mode = #tpu.pipeline_mode<synchronous>, transform_indices = @transform_5, window_bounds = array<i64: 6, 96>}, {transform_indices = @transform_6, window_bounds = array<i64: 2, 32>}]} {
    %c0 = arith.constant 0 : index
    %c0_0 = arith.constant 0 : index
    %0 = vector.load %arg6[%c0, %c0_0] : memref<6x96xf32, #tpu.memory_space<vmem>>, vector<6x96xf32>
    %1 = vector.extract_strided_slice %0 {offsets = [0, 0], sizes = [1, 96], strides = [1, 1]} : vector<6x96xf32> to vector<1x96xf32>
    %2 = vector.extract_strided_slice %0 {offsets = [1, 0], sizes = [1, 32], strides = [1, 1]} : vector<6x96xf32> to vector<1x32xf32>
    %3 = vector.extract_strided_slice %0 {offsets = [2, 0], sizes = [1, 32], strides = [1, 1]} : vector<6x96xf32> to vector<1x32xf32>
    %4 = vector.extract_strided_slice %0 {offsets = [3, 0], sizes = [1, 32], strides = [1, 1]} : vector<6x96xf32> to vector<1x32xf32>
    %5 = vector.extract_strided_slice %0 {offsets = [4, 0], sizes = [1, 64], strides = [1, 1]} : vector<6x96xf32> to vector<1x64xf32>
    %6 = vector.extract_strided_slice %0 {offsets = [5, 0], sizes = [1, 32], strides = [1, 1]} : vector<6x96xf32> to vector<1x32xf32>
    %c0_1 = arith.constant 0 : index
    %c0_2 = arith.constant 0 : index
    %7 = vector.load %arg1[%c0_1, %c0_2] : memref<8x180xf32, #tpu.memory_space<vmem>>, vector<8x180xf32>
    %c0_3 = arith.constant 0 : index
    %c0_4 = arith.constant 0 : index
    %8 = vector.load %arg2[%c0_3, %c0_4] : memref<180x32xf32, #tpu.memory_space<vmem>>, vector<180x32xf32>
    %cst = arith.constant dense<0.000000e+00> : vector<8x32xf32>
    %9 = tpu.matmul %7, %8, %cst {dimension_numbers = #tpu.dot_dimension_numbers<[1], [0], [0], [1], [0, 0, 1, 1], [], []>} : vector<8x180xf32>, vector<180x32xf32>, vector<8x32xf32> -> vector<8x32xf32>
    %c0_5 = arith.constant 0 : index
    %c0_6 = arith.constant 0 : index
    %10 = vector.load %arg3[%c0_5, %c0_6] : memref<32x96xf32, #tpu.memory_space<vmem>>, vector<32x96xf32>
    %cst_7 = arith.constant dense<0.000000e+00> : vector<8x96xf32>
    %11 = tpu.matmul %9, %10, %cst_7 {dimension_numbers = #tpu.dot_dimension_numbers<[1], [0], [0], [1], [0, 0, 1, 1], [], []>} : vector<8x32xf32>, vector<32x96xf32>, vector<8x96xf32> -> vector<8x96xf32>
    %12 = vector.broadcast %1 : vector<1x96xf32> to vector<8x96xf32>
    %13 = arith.addf %11, %12 : vector<8x96xf32>
    %14 = vector.extract_strided_slice %13 {offsets = [0, 0], sizes = [8, 32], strides = [1, 1]} : vector<8x96xf32> to vector<8x32xf32>
    %15 = vector.extract_strided_slice %13 {offsets = [0, 32], sizes = [8, 32], strides = [1, 1]} : vector<8x96xf32> to vector<8x32xf32>
    %16 = vector.extract_strided_slice %13 {offsets = [0, 64], sizes = [8, 32], strides = [1, 1]} : vector<8x96xf32> to vector<8x32xf32>
    %17 = tpu.iota {dimensions = array<i32: 0>} : vector<8x8xi32>
    %18 = tpu.iota {dimensions = array<i32: 1>} : vector<8x8xi32>
    %c1_i32 = arith.constant 1 : i32
    %19 = vector.broadcast %c1_i32 : i32 to vector<8x8xi32>
    %20 = arith.andi %17, %19 : vector<8x8xi32>
    %c1_i32_8 = arith.constant 1 : i32
    %21 = vector.broadcast %c1_i32_8 : i32 to vector<8x8xi32>
    %22 = arith.andi %18, %21 : vector<8x8xi32>
    %23 = arith.cmpi eq, %20, %22 : vector<8x8xi32>
    %c0_9 = arith.constant 0 : index
    %c0_10 = arith.constant 0 : index
    %24 = vector.load %arg4[%c0_9, %c0_10] : memref<32x96xf32, #tpu.memory_space<vmem>>, vector<32x96xf32>
    %25 = vector.extract_strided_slice %14 {offsets = [0, 0], sizes = [8, 8], strides = [1, 1]} : vector<8x32xf32> to vector<8x8xf32>
    %26 = vector.extract_strided_slice %15 {offsets = [0, 0], sizes = [8, 8], strides = [1, 1]} : vector<8x32xf32> to vector<8x8xf32>
    %27 = vector.extract_strided_slice %16 {offsets = [0, 0], sizes = [8, 8], strides = [1, 1]} : vector<8x32xf32> to vector<8x8xf32>
    %cst_11 = arith.constant dense<0.000000e+00> : vector<8x8xf32>
    %28 = tpu.matmul %25, %26, %cst_11 {dimension_numbers = #tpu.dot_dimension_numbers<[1], [1], [0], [0], [0, 0, 1, 0], [], []>} : vector<8x8xf32>, vector<8x8xf32>, vector<8x8xf32> -> vector<8x8xf32>
    %cst_12 = arith.constant -1.000000e+30 : f32
    %29 = vector.broadcast %cst_12 : f32 to vector<8x8xf32>
    %30 = arith.select %23, %28, %29 : vector<8x8xi1>, vector<8x8xf32>
    %cst_13 = arith.constant dense<0xFF800000> : vector<8xf32>
    %31 = vector.multi_reduction <maximumf>, %30, %cst_13 [1] : vector<8x8xf32> to vector<8xf32>
    %32 = vector.shape_cast %31 : vector<8xf32> to vector<8x1xf32>
    %33 = vector.broadcast %32 : vector<8x1xf32> to vector<8x8xf32>
    %34 = arith.subf %30, %33 : vector<8x8xf32>
    %35 = math.exp %34 : vector<8x8xf32>
    %cst_14 = arith.constant dense<0.000000e+00> : vector<8xf32>
    %36 = vector.multi_reduction <add>, %35, %cst_14 [1] : vector<8x8xf32> to vector<8xf32>
    %37 = vector.shape_cast %36 : vector<8xf32> to vector<8x1xf32>
    %38 = vector.broadcast %37 : vector<8x1xf32> to vector<8x8xf32>
    %39 = arith.divf %35, %38 : vector<8x8xf32>
    %cst_15 = arith.constant dense<0.000000e+00> : vector<8x8xf32>
    %40 = tpu.matmul %39, %27, %cst_15 {dimension_numbers = #tpu.dot_dimension_numbers<[1], [0], [0], [1], [0, 0, 1, 1], [], []>} : vector<8x8xf32>, vector<8x8xf32>, vector<8x8xf32> -> vector<8x8xf32>
    %41 = vector.extract_strided_slice %14 {offsets = [0, 8], sizes = [8, 8], strides = [1, 1]} : vector<8x32xf32> to vector<8x8xf32>
    %42 = vector.extract_strided_slice %15 {offsets = [0, 8], sizes = [8, 8], strides = [1, 1]} : vector<8x32xf32> to vector<8x8xf32>
    %43 = vector.extract_strided_slice %16 {offsets = [0, 8], sizes = [8, 8], strides = [1, 1]} : vector<8x32xf32> to vector<8x8xf32>
    %cst_16 = arith.constant dense<0.000000e+00> : vector<8x8xf32>
    %44 = tpu.matmul %41, %42, %cst_16 {dimension_numbers = #tpu.dot_dimension_numbers<[1], [1], [0], [0], [0, 0, 1, 0], [], []>} : vector<8x8xf32>, vector<8x8xf32>, vector<8x8xf32> -> vector<8x8xf32>
    %cst_17 = arith.constant -1.000000e+30 : f32
    %45 = vector.broadcast %cst_17 : f32 to vector<8x8xf32>
    %46 = arith.select %23, %44, %45 : vector<8x8xi1>, vector<8x8xf32>
    %cst_18 = arith.constant dense<0xFF800000> : vector<8xf32>
    %47 = vector.multi_reduction <maximumf>, %46, %cst_18 [1] : vector<8x8xf32> to vector<8xf32>
    %48 = vector.shape_cast %47 : vector<8xf32> to vector<8x1xf32>
    %49 = vector.broadcast %48 : vector<8x1xf32> to vector<8x8xf32>
    %50 = arith.subf %46, %49 : vector<8x8xf32>
    %51 = math.exp %50 : vector<8x8xf32>
    %cst_19 = arith.constant dense<0.000000e+00> : vector<8xf32>
    %52 = vector.multi_reduction <add>, %51, %cst_19 [1] : vector<8x8xf32> to vector<8xf32>
    %53 = vector.shape_cast %52 : vector<8xf32> to vector<8x1xf32>
    %54 = vector.broadcast %53 : vector<8x1xf32> to vector<8x8xf32>
    %55 = arith.divf %51, %54 : vector<8x8xf32>
    %cst_20 = arith.constant dense<0.000000e+00> : vector<8x8xf32>
    %56 = tpu.matmul %55, %43, %cst_20 {dimension_numbers = #tpu.dot_dimension_numbers<[1], [0], [0], [1], [0, 0, 1, 1], [], []>} : vector<8x8xf32>, vector<8x8xf32>, vector<8x8xf32> -> vector<8x8xf32>
    %57 = vector.extract_strided_slice %14 {offsets = [0, 16], sizes = [8, 8], strides = [1, 1]} : vector<8x32xf32> to vector<8x8xf32>
    %58 = vector.extract_strided_slice %15 {offsets = [0, 16], sizes = [8, 8], strides = [1, 1]} : vector<8x32xf32> to vector<8x8xf32>
    %59 = vector.extract_strided_slice %16 {offsets = [0, 16], sizes = [8, 8], strides = [1, 1]} : vector<8x32xf32> to vector<8x8xf32>
    %cst_21 = arith.constant dense<0.000000e+00> : vector<8x8xf32>
    %60 = tpu.matmul %57, %58, %cst_21 {dimension_numbers = #tpu.dot_dimension_numbers<[1], [1], [0], [0], [0, 0, 1, 0], [], []>} : vector<8x8xf32>, vector<8x8xf32>, vector<8x8xf32> -> vector<8x8xf32>
    %cst_22 = arith.constant -1.000000e+30 : f32
    %61 = vector.broadcast %cst_22 : f32 to vector<8x8xf32>
    %62 = arith.select %23, %60, %61 : vector<8x8xi1>, vector<8x8xf32>
    %cst_23 = arith.constant dense<0xFF800000> : vector<8xf32>
    %63 = vector.multi_reduction <maximumf>, %62, %cst_23 [1] : vector<8x8xf32> to vector<8xf32>
    %64 = vector.shape_cast %63 : vector<8xf32> to vector<8x1xf32>
    %65 = vector.broadcast %64 : vector<8x1xf32> to vector<8x8xf32>
    %66 = arith.subf %62, %65 : vector<8x8xf32>
    %67 = math.exp %66 : vector<8x8xf32>
    %cst_24 = arith.constant dense<0.000000e+00> : vector<8xf32>
    %68 = vector.multi_reduction <add>, %67, %cst_24 [1] : vector<8x8xf32> to vector<8xf32>
    %69 = vector.shape_cast %68 : vector<8xf32> to vector<8x1xf32>
    %70 = vector.broadcast %69 : vector<8x1xf32> to vector<8x8xf32>
    %71 = arith.divf %67, %70 : vector<8x8xf32>
    %cst_25 = arith.constant dense<0.000000e+00> : vector<8x8xf32>
    %72 = tpu.matmul %71, %59, %cst_25 {dimension_numbers = #tpu.dot_dimension_numbers<[1], [0], [0], [1], [0, 0, 1, 1], [], []>} : vector<8x8xf32>, vector<8x8xf32>, vector<8x8xf32> -> vector<8x8xf32>
    %73 = vector.extract_strided_slice %14 {offsets = [0, 24], sizes = [8, 8], strides = [1, 1]} : vector<8x32xf32> to vector<8x8xf32>
    %74 = vector.extract_strided_slice %15 {offsets = [0, 24], sizes = [8, 8], strides = [1, 1]} : vector<8x32xf32> to vector<8x8xf32>
    %75 = vector.extract_strided_slice %16 {offsets = [0, 24], sizes = [8, 8], strides = [1, 1]} : vector<8x32xf32> to vector<8x8xf32>
    %cst_26 = arith.constant dense<0.000000e+00> : vector<8x8xf32>
    %76 = tpu.matmul %73, %74, %cst_26 {dimension_numbers = #tpu.dot_dimension_numbers<[1], [1], [0], [0], [0, 0, 1, 0], [], []>} : vector<8x8xf32>, vector<8x8xf32>, vector<8x8xf32> -> vector<8x8xf32>
    %cst_27 = arith.constant -1.000000e+30 : f32
    %77 = vector.broadcast %cst_27 : f32 to vector<8x8xf32>
    %78 = arith.select %23, %76, %77 : vector<8x8xi1>, vector<8x8xf32>
    %cst_28 = arith.constant dense<0xFF800000> : vector<8xf32>
    %79 = vector.multi_reduction <maximumf>, %78, %cst_28 [1] : vector<8x8xf32> to vector<8xf32>
    %80 = vector.shape_cast %79 : vector<8xf32> to vector<8x1xf32>
    %81 = vector.broadcast %80 : vector<8x1xf32> to vector<8x8xf32>
    %82 = arith.subf %78, %81 : vector<8x8xf32>
    %83 = math.exp %82 : vector<8x8xf32>
    %cst_29 = arith.constant dense<0.000000e+00> : vector<8xf32>
    %84 = vector.multi_reduction <add>, %83, %cst_29 [1] : vector<8x8xf32> to vector<8xf32>
    %85 = vector.shape_cast %84 : vector<8xf32> to vector<8x1xf32>
    %86 = vector.broadcast %85 : vector<8x1xf32> to vector<8x8xf32>
    %87 = arith.divf %83, %86 : vector<8x8xf32>
    %cst_30 = arith.constant dense<0.000000e+00> : vector<8x8xf32>
    %88 = tpu.matmul %87, %75, %cst_30 {dimension_numbers = #tpu.dot_dimension_numbers<[1], [0], [0], [1], [0, 0, 1, 1], [], []>} : vector<8x8xf32>, vector<8x8xf32>, vector<8x8xf32> -> vector<8x8xf32>
    %89 = tpu.concatenate %40, %56, %72, %88 in 1 : vector<8x8xf32>, vector<8x8xf32>, vector<8x8xf32>, vector<8x8xf32> -> vector<8x32xf32>
    %90 = vector.extract_strided_slice %24 {offsets = [0, 0], sizes = [32, 32], strides = [1, 1]} : vector<32x96xf32> to vector<32x32xf32>
    %cst_31 = arith.constant dense<0.000000e+00> : vector<8x32xf32>
    %91 = tpu.matmul %89, %90, %cst_31 {dimension_numbers = #tpu.dot_dimension_numbers<[1], [0], [0], [1], [0, 0, 1, 1], [], []>} : vector<8x32xf32>, vector<32x32xf32>, vector<8x32xf32> -> vector<8x32xf32>
    %92 = vector.broadcast %2 : vector<1x32xf32> to vector<8x32xf32>
    %93 = arith.addf %91, %92 : vector<8x32xf32>
    %94 = arith.addf %9, %93 : vector<8x32xf32>
    %cst_32 = arith.constant dense<0.000000e+00> : vector<8xf32>
    %95 = vector.multi_reduction <add>, %94, %cst_32 [1] : vector<8x32xf32> to vector<8xf32>
    %96 = vector.shape_cast %95 : vector<8xf32> to vector<8x1xf32>
    %cst_33 = arith.constant 3.200000e+01 : f32
    %97 = vector.broadcast %cst_33 : f32 to vector<8x1xf32>
    %98 = arith.divf %96, %97 : vector<8x1xf32>
    %99 = vector.broadcast %98 : vector<8x1xf32> to vector<8x32xf32>
    %100 = arith.subf %94, %99 : vector<8x32xf32>
    %101 = arith.mulf %100, %100 : vector<8x32xf32>
    %cst_34 = arith.constant dense<0.000000e+00> : vector<8xf32>
    %102 = vector.multi_reduction <add>, %101, %cst_34 [1] : vector<8x32xf32> to vector<8xf32>
    %103 = vector.shape_cast %102 : vector<8xf32> to vector<8x1xf32>
    %cst_35 = arith.constant 3.200000e+01 : f32
    %104 = vector.broadcast %cst_35 : f32 to vector<8x1xf32>
    %105 = arith.divf %103, %104 : vector<8x1xf32>
    %106 = vector.broadcast %98 : vector<8x1xf32> to vector<8x32xf32>
    %107 = arith.subf %94, %106 : vector<8x32xf32>
    %cst_36 = arith.constant 9.99999974E-6 : f32
    %108 = vector.broadcast %cst_36 : f32 to vector<8x1xf32>
    %109 = arith.addf %105, %108 : vector<8x1xf32>
    %110 = math.rsqrt %109 : vector<8x1xf32>
    %111 = vector.broadcast %110 : vector<8x1xf32> to vector<8x32xf32>
    %112 = arith.mulf %107, %111 : vector<8x32xf32>
    %113 = vector.broadcast %3 : vector<1x32xf32> to vector<8x32xf32>
    %114 = arith.mulf %112, %113 : vector<8x32xf32>
    %115 = vector.broadcast %4 : vector<1x32xf32> to vector<8x32xf32>
    %116 = arith.addf %114, %115 : vector<8x32xf32>
    %117 = vector.extract_strided_slice %24 {offsets = [0, 32], sizes = [32, 64], strides = [1, 1]} : vector<32x96xf32> to vector<32x64xf32>
    %cst_37 = arith.constant dense<0.000000e+00> : vector<8x64xf32>
    %118 = tpu.matmul %116, %117, %cst_37 {dimension_numbers = #tpu.dot_dimension_numbers<[1], [0], [0], [1], [0, 0, 1, 1], [], []>} : vector<8x32xf32>, vector<32x64xf32>, vector<8x64xf32> -> vector<8x64xf32>
    %119 = vector.broadcast %5 : vector<1x64xf32> to vector<8x64xf32>
    %120 = arith.addf %118, %119 : vector<8x64xf32>
    %cst_38 = arith.constant 0.000000e+00 : f32
    %121 = vector.broadcast %cst_38 : f32 to vector<8x64xf32>
    %122 = arith.maximumf %120, %121 : vector<8x64xf32>
    %c0_39 = arith.constant 0 : index
    %c0_40 = arith.constant 0 : index
    %123 = vector.load %arg5[%c0_39, %c0_40] : memref<64x32xf32, #tpu.memory_space<vmem>>, vector<64x32xf32>
    %cst_41 = arith.constant dense<0.000000e+00> : vector<8x32xf32>
    %124 = tpu.matmul %122, %123, %cst_41 {dimension_numbers = #tpu.dot_dimension_numbers<[1], [0], [0], [1], [0, 0, 1, 1], [], []>} : vector<8x64xf32>, vector<64x32xf32>, vector<8x32xf32> -> vector<8x32xf32>
    %125 = vector.broadcast %6 : vector<1x32xf32> to vector<8x32xf32>
    %126 = arith.addf %124, %125 : vector<8x32xf32>
    %127 = arith.addf %116, %126 : vector<8x32xf32>
    %cst_42 = arith.constant dense<0.000000e+00> : vector<8xf32>
    %128 = vector.multi_reduction <add>, %127, %cst_42 [1] : vector<8x32xf32> to vector<8xf32>
    %129 = vector.shape_cast %128 : vector<8xf32> to vector<8x1xf32>
    %cst_43 = arith.constant 3.200000e+01 : f32
    %130 = vector.broadcast %cst_43 : f32 to vector<8x1xf32>
    %131 = arith.divf %129, %130 : vector<8x1xf32>
    %132 = vector.broadcast %131 : vector<8x1xf32> to vector<8x32xf32>
    %133 = arith.subf %127, %132 : vector<8x32xf32>
    %134 = arith.mulf %133, %133 : vector<8x32xf32>
    %cst_44 = arith.constant dense<0.000000e+00> : vector<8xf32>
    %135 = vector.multi_reduction <add>, %134, %cst_44 [1] : vector<8x32xf32> to vector<8xf32>
    %136 = vector.shape_cast %135 : vector<8xf32> to vector<8x1xf32>
    %cst_45 = arith.constant 3.200000e+01 : f32
    %137 = vector.broadcast %cst_45 : f32 to vector<8x1xf32>
    %138 = arith.divf %136, %137 : vector<8x1xf32>
    %139 = vector.broadcast %131 : vector<8x1xf32> to vector<8x32xf32>
    %140 = arith.subf %127, %139 : vector<8x32xf32>
    %cst_46 = arith.constant 9.99999974E-6 : f32
    %141 = vector.broadcast %cst_46 : f32 to vector<8x1xf32>
    %142 = arith.addf %138, %141 : vector<8x1xf32>
    %143 = math.rsqrt %142 : vector<8x1xf32>
    %144 = vector.broadcast %143 : vector<8x1xf32> to vector<8x32xf32>
    %145 = arith.mulf %140, %144 : vector<8x32xf32>
    %146 = vector.broadcast %3 : vector<1x32xf32> to vector<8x32xf32>
    %147 = arith.mulf %145, %146 : vector<8x32xf32>
    %148 = vector.broadcast %4 : vector<1x32xf32> to vector<8x32xf32>
    %149 = arith.addf %147, %148 : vector<8x32xf32>
    %150 = vector.extract_strided_slice %149 {offsets = [0, 0], sizes = [2, 32], strides = [1, 1]} : vector<8x32xf32> to vector<2x32xf32>
    %151 = vector.extract_strided_slice %149 {offsets = [2, 0], sizes = [2, 32], strides = [1, 1]} : vector<8x32xf32> to vector<2x32xf32>
    %152 = arith.addf %150, %151 : vector<2x32xf32>
    %153 = vector.extract_strided_slice %149 {offsets = [4, 0], sizes = [2, 32], strides = [1, 1]} : vector<8x32xf32> to vector<2x32xf32>
    %154 = arith.addf %152, %153 : vector<2x32xf32>
    %155 = vector.extract_strided_slice %149 {offsets = [6, 0], sizes = [2, 32], strides = [1, 1]} : vector<8x32xf32> to vector<2x32xf32>
    %156 = arith.addf %154, %155 : vector<2x32xf32>
    %cst_47 = arith.constant 2.500000e-01 : f32
    %157 = vector.broadcast %cst_47 : f32 to vector<2x32xf32>
    %158 = arith.mulf %156, %157 : vector<2x32xf32>
    %c0_48 = arith.constant 0 : index
    %c0_49 = arith.constant 0 : index
    %159 = vector.load %arg7[%c0_48, %c0_49] : memref<2x32xf32, #tpu.memory_space<vmem>>, vector<2x32xf32>
    tpu.vector_store %arg7[%c0_48, %c0_49], %158 {strides = array<i32>} : memref<2x32xf32, #tpu.memory_space<vmem>>, vector<2x32xf32>,
    return
  }
  func.func @transform_0(%arg0: i32) -> (i32, i32) {
    %c0_i32 = arith.constant 0 : i32
    %c0_i32_0 = arith.constant 0 : i32
    return %arg0, %c0_i32 : i32, i32
  }
  func.func @transform_1(%arg0: i32) -> (i32, i32) {
    %c0_i32 = arith.constant 0 : i32
    %c0_i32_0 = arith.constant 0 : i32
    %c0_i32_1 = arith.constant 0 : i32
    return %c0_i32, %c0_i32_0 : i32, i32
  }
  func.func @transform_2(%arg0: i32) -> (i32, i32) {
    %c0_i32 = arith.constant 0 : i32
    %c0_i32_0 = arith.constant 0 : i32
    %c0_i32_1 = arith.constant 0 : i32
    return %c0_i32, %c0_i32_0 : i32, i32
  }
  func.func @transform_3(%arg0: i32) -> (i32, i32) {
    %c0_i32 = arith.constant 0 : i32
    %c0_i32_0 = arith.constant 0 : i32
    %c0_i32_1 = arith.constant 0 : i32
    return %c0_i32, %c0_i32_0 : i32, i32
  }
  func.func @transform_4(%arg0: i32) -> (i32, i32) {
    %c0_i32 = arith.constant 0 : i32
    %c0_i32_0 = arith.constant 0 : i32
    %c0_i32_1 = arith.constant 0 : i32
    return %c0_i32, %c0_i32_0 : i32, i32
  }
  func.func @transform_5(%arg0: i32) -> (i32, i32) {
    %c0_i32 = arith.constant 0 : i32
    %c0_i32_0 = arith.constant 0 : i32
    %c0_i32_1 = arith.constant 0 : i32
    return %c0_i32, %c0_i32_0 : i32, i32
  }
  func.func @transform_6(%arg0: i32) -> (i32, i32) {
    %c0_i32 = arith.constant 0 : i32
    %c0_i32_0 = arith.constant 0 : i32
    return %arg0, %c0_i32 : i32, i32
  }
}

</mosaic_0001>

<llo_original>
// kernel: forward.1
$region0: #{forward.1}
  #allocation0 [shape = 'u32[]', space=smem, size = 0x4, offset = 0x4, fixed_abs, tag = 'smem constant byte address 0x4 - core index']
  #allocation1 [shape = 'u32[144,128]{1,0:T(1,128)}', space=vmem, size = 0x12000, scoped, tag = 'internal scratch']
  %s0 = inlined_call_operand.vmem [shape: f32[8,180], index: 0, kind: input, shape index: {}]
  %s1 = inlined_call_operand.hbm [shape: f32[180,32], index: 1, kind: input, shape index: {}]
  %s2 = inlined_call_operand.vmem [shape: f32[32,96], index: 2, kind: input, shape index: {}]
  %s3 = inlined_call_operand.vmem [shape: f32[32,96], index: 3, kind: input, shape index: {}]
  %s4 = inlined_call_operand.vmem [shape: f32[64,32], index: 4, kind: input, shape index: {}]
  %s5 = inlined_call_operand.vmem [shape: f32[6,96], index: 5, kind: input, shape index: {}]
  %s6 = inlined_call_operand.hbm [shape: f32[2,32], index: 6, kind: output, shape index: {}]
  %s7 = sld [smem:[#allocation0]]
  $region38: #{forward.1} parent=0
    _
  %s9 = ssub.s32 1, %s7
  %s10 = scalar_select 0, %s9, %s7
  $region1: #{forward.1} parent=0
    #allocation2 [shape = 'u8[94208]{0}', space=vmem, size = 0x17000, scoped, tag = 'input window, operand 1, single buffered']
    #allocation3 [shape = 's32[1]{0}', space=sflag, size = 0x4, scoped, tag = 'scoped memory for forward.1']
    #allocation4 [shape = 's32[1]{0}', space=sflag, size = 0x4, scoped, tag = 'scoped memory for forward.1']
    #allocation5 [shape = 'u8[1024]{0}', space=vmem, size = 0x400, scoped, tag = 'output window, operand 0, single buffered']
    %11 = vsyncpa [#allocation3], 0
    %12 = vsyncpa [#allocation4], 0
    // Predicated region
    $region2: #{forward.1} parent=1 // pred_check
      _
    $region3: #{forward.1} parent=1 // pred_check_branch
      %14 = sbr.rel (0) target = $region5
    $region4: #{forward.1} parent=1 // pred_region
      _
    $region5: #{forward.1} parent=1 // pred_fallthru
      _
    // Predicated region
    $region6: #{forward.1} parent=1 // pred_check
      _
    $region7: #{forward.1} parent=1 // pred_check_branch
      %16 = sbr.rel (0) target = $region9
    $region8: #{forward.1} parent=1 // pred_region
      %s18 = ssub.s32 2944, 2944
      %19 = vsyncadd [#allocation3], %s18
      %s20 = sshll.u32 [#allocation2], 4
      %s21 = int_to_ptr.vmem [resolvable:$true] %s20
      %26 = dma.hbm_to_vmem [thread:$0]  %s1, 2944, %s21, [#allocation3], 128, 128, 8
    $region9: #{forward.1} parent=1 // pred_fallthru
      _
    // Predicated region
    $region10: #{forward.1} parent=1 // pred_check
      _
    $region11: #{forward.1} parent=1 // pred_check_branch
      %28 = sbr.rel (0) target = $region13
    $region12: #{forward.1} parent=1 // pred_region
      _
    $region13: #{forward.1} parent=1 // pred_fallthru
      _
    // Predicated region
    $region14: #{forward.1} parent=1 // pred_check
      _
    $region15: #{forward.1} parent=1 // pred_check_branch
      %30 = sbr.rel (0) target = $region17
    $region16: #{forward.1} parent=1 // pred_region
      _
    $region17: #{forward.1} parent=1 // pred_fallthru
      _
    // Predicated region
    $region18: #{forward.1} parent=1 // pred_check
      _
    $region19: #{forward.1} parent=1 // pred_check_branch
      %32 = sbr.rel (0) target = $region21
    $region20: #{forward.1} parent=1 // pred_region
      _
    $region21: #{forward.1} parent=1 // pred_fallthru
      _
    // Predicated region
    $region22: #{forward.1} parent=1 // pred_check
      _
    $region23: #{forward.1} parent=1 // pred_check_branch
      %34 = sbr.rel (0) target = $region25
    $region24: #{forward.1} parent=1 // pred_region
      _
    $region25: #{forward.1} parent=1 // pred_fallthru
      _
    // Predicated region
    $region26: #{forward.1} parent=1 // pred_check
      _
    $region27: #{forward.1} parent=1 // pred_check_branch
      %36 = sbr.rel (0) target = $region29
    $region28: #{forward.1} parent=1 // pred_region
      %37 = dma.done [#allocation3], 2944
    $region29: #{forward.1} parent=1 // pred_fallthru
      _
    %v38 = vld [vmem:[%s5] sm:$0x3f]
    %v39 = vld [vmem:[%s0] sm:$0xff]
    %v40 = vld [vmem:[%s0 + $0x8] sm:$0xff]
    %v41 = vld [vmem:[#allocation2] sm:$0xff]
    %v42 = vld [vmem:[#allocation2 + $0x8] sm:$0xff]
    %v43 = vld [vmem:[#allocation2 + $0x10] sm:$0xff]
    %v44 = vld [vmem:[#allocation2 + $0x18] sm:$0xff]
    %v45 = vld [vmem:[#allocation2 + $0x20] sm:$0xff]
    %v46 = vld [vmem:[#allocation2 + $0x28] sm:$0xff]
    %v47 = vld [vmem:[#allocation2 + $0x30] sm:$0xff]
    %v48 = vld [vmem:[#allocation2 + $0x38] sm:$0xff]
    %v49 = vld [vmem:[#allocation2 + $0x40] sm:$0xff]
    %v50 = vld [vmem:[#allocation2 + $0x48] sm:$0xff]
    %v51 = vld [vmem:[#allocation2 + $0x50] sm:$0xff]
    %v52 = vld [vmem:[#allocation2 + $0x58] sm:$0xff]
    %v53 = vld [vmem:[#allocation2 + $0x60] sm:$0xff]
    %v54 = vld [vmem:[#allocation2 + $0x68] sm:$0xff]
    %v55 = vld [vmem:[#allocation2 + $0x70] sm:$0xff]
    %v56 = vld [vmem:[#allocation2 + $0x78] sm:$0xff]
    %v57 = vld [vmem:[#allocation2 + $0x80] sm:$0xff]
    %v58 = vld [vmem:[#allocation2 + $0x88] sm:$0xff]
    %v59 = vld [vmem:[#allocation2 + $0x90] sm:$0xff]
    %v60 = vld [vmem:[#allocation2 + $0x98] sm:$0xff]
    %v61 = vld [vmem:[#allocation2 + $0xa0] sm:$0xff]
    %v62 = vld [vmem:[#allocation2 + $0xa8] sm:$0xff]
    %v63 = vld [vmem:[#allocation2 + $0xb0] sm:$0xf]
    %vm64 = vcmask 424960
    %v66 = vsel %vm64, %v40, 0
    %vm68 = vcmask 1043456
    %v70 = vsel %vm68, %v63, 0
    %72 = vmatprep.subr.mxu0 0.0
    %73 = vmatpush1.msra.mxu0 %v41
    %74 = vmatprep.subr.mxu0 0.0
    %75 = vmatpush1.msra.mxu0 %v42
    %76 = vmatprep.subr.mxu0 0.0
    %77 = vmatpush1.msra.mxu0 %v43
    %78 = vmatprep.subr.mxu0 0.0
    %79 = vmatpush1.msra.mxu0 %v44
    %80 = vmatprep.subr.mxu0 0.0
    %81 = vmatpush1.msra.mxu0 %v45
    %82 = vmatprep.subr.mxu0 0.0
    %83 = vmatpush1.msra.mxu0 %v46
    %84 = vmatprep.subr.mxu0 0.0
    %85 = vmatpush1.msra.mxu0 %v47
    %86 = vmatprep.subr.mxu0 0.0
    %87 = vmatpush1.msra.mxu0 %v48
    %88 = vmatprep.subr.mxu0 0.0
    %89 = vmatpush1.msra.mxu0 %v49
    %90 = vmatprep.subr.mxu0 0.0
    %91 = vmatpush1.msra.mxu0 %v50
    %92 = vmatprep.subr.mxu0 0.0
    %93 = vmatpush1.msra.mxu0 %v51
    %94 = vmatprep.subr.mxu0 0.0
    %95 = vmatpush1.msra.mxu0 %v52
    %96 = vmatprep.subr.mxu0 0.0
    %97 = vmatpush1.msra.mxu0 %v53
    %98 = vmatprep.subr.mxu0 0.0
    %99 = vmatpush1.msra.mxu0 %v54
    %100 = vmatprep.subr.mxu0 0.0
    %101 = vmatpush1.msra.mxu0 %v55
    %102 = vmatprep.subr.mxu0 0.0
    %103 = vmatpush1.msra.mxu0 %v56
    %104 = vmatprep.subr.mxu0 0.0
    %105 = vmatpush1.msra.mxu0 %v57
    %106 = vmatprep.subr.mxu0 0.0
    %107 = vmatpush1.msra.mxu0 %v58
    %108 = vmatprep.subr.mxu0 0.0
    %109 = vmatpush1.msra.mxu0 %v59
    %110 = vmatprep.subr.mxu0 0.0
    %111 = vmatpush1.msra.mxu0 %v60
    %112 = vmatprep.subr.mxu0 0.0
    %113 = vmatpush1.msra.mxu0 %v61
    %114 = vmatprep.subr.mxu0 0.0
    %115 = vmatpush1.msra.mxu0 %v62
    %116 = vmatprep.subr.mxu0 0.0
    %117 = vmatpush1.msra.mxu0 %v70
    %118 = vmatprep.subr.mxu0 0.0
    %119 = vmatpush1.msra.mxu0 0.0
    %120 = vmatprep.subr.mxu0 0.0
    %121 = vmatpush1.msra.mxu0 0.0
    %122 = vmatprep.subr.mxu0 0.0
    %123 = vmatpush1.msra.mxu0 0.0
    %124 = vmatprep.subr.mxu0 0.0
    %125 = vmatpush1.msra.mxu0 0.0
    %126 = vmatprep.subr.mxu0 0.0
    %127 = vmatpush1.msra.mxu0 0.0
    %128 = vmatprep.subr.mxu0 0.0
    %129 = vmatpush1.msra.mxu0 0.0
    %130 = vmatprep.subr.mxu0 0.0
    %131 = vmatpush1.msra.mxu0 0.0
    %132 = vmatprep.subr.mxu0 0.0
    %133 = vmatpush1.msra.mxu0 0.0
    %134 = vmatprep.subr.mxu0 0.0
    %135 = vmatpush1.msra.mxu0 0.0
    %136 = vmatprep.mubr.f32.mxu0 %v66
    %137 = vmatmul.mubr.f32.gmra.mrb[0].mxu0 %v39
    %v138 = vpop.f32.mrb[0].mxu0
    %v139 = vadd.f32 0.0, %v138
    %v140 = vpop.f32.mrb[0].mxu0
    %141 = vdwg.mxu0
    %v142 = vld [vmem:[%s2] sm:$0xff]
    %v143 = vld [vmem:[%s2 + $0x8] sm:$0xff]
    %v144 = vld [vmem:[%s2 + $0x10] sm:$0xff]
    %v145 = vld [vmem:[%s2 + $0x18] sm:$0xff]
    %v146 = vlaneseq
    %v147 = vshrl.u32 %v146, 7
    %v148 = vsub.s32 0, %v147
    %v149 = vrot.slane %v38, %v148
    %vm150 = vcmask 261120
    %v152 = vsel %vm150, %v139, 0
    %154 = vmatprep.subr.mxu0 0.0
    %155 = vmatpush1.msra.mxu0 %v142
    %156 = vmatprep.subr.mxu0 0.0
    %157 = vmatpush1.msra.mxu0 %v143
    %158 = vmatprep.subr.mxu0 0.0
    %159 = vmatpush1.msra.mxu0 %v144
    %160 = vmatprep.subr.mxu0 0.0
    %161 = vmatpush1.msra.mxu0 %v145
    %162 = vmatprep.subr.mxu0 0.0
    %163 = vmatpush1.msra.mxu0 0.0
    %164 = vmatprep.subr.mxu0 0.0
    %165 = vmatpush1.msra.mxu0 0.0
    %166 = vmatprep.subr.mxu0 0.0
    %167 = vmatpush1.msra.mxu0 0.0
    %168 = vmatprep.subr.mxu0 0.0
    %169 = vmatpush1.msra.mxu0 0.0
    %170 = vmatprep.subr.mxu0 0.0
    %171 = vmatpush1.msra.mxu0 0.0
    %172 = vmatprep.subr.mxu0 0.0
    %173 = vmatpush1.msra.mxu0 0.0
    %174 = vmatprep.subr.mxu0 0.0
    %175 = vmatpush1.msra.mxu0 0.0
    %176 = vmatprep.subr.mxu0 0.0
    %177 = vmatpush1.msra.mxu0 0.0
    %178 = vmatprep.subr.mxu0 0.0
    %179 = vmatpush1.msra.mxu0 0.0
    %180 = vmatprep.subr.mxu0 0.0
    %181 = vmatpush1.msra.mxu0 0.0
    %182 = vmatprep.subr.mxu0 0.0
    %183 = vmatpush1.msra.mxu0 0.0
    %184 = vmatprep.subr.mxu0 0.0
    %185 = vmatpush1.msra.mxu0 0.0
    %186 = vmatprep.subr.mxu0 0.0
    %187 = vmatpush1.msra.mxu0 0.0
    %188 = vmatprep.subr.mxu0 0.0
    %189 = vmatpush1.msra.mxu0 0.0
    %190 = vmatprep.subr.mxu0 0.0
    %191 = vmatpush1.msra.mxu0 0.0
    %192 = vmatprep.subr.mxu0 0.0
    %193 = vmatpush1.msra.mxu0 0.0
    %194 = vmatprep.subr.mxu0 0.0
    %195 = vmatpush1.msra.mxu0 0.0
    %196 = vmatprep.subr.mxu0 0.0
    %197 = vmatpush1.msra.mxu0 0.0
    %198 = vmatprep.subr.mxu0 0.0
    %199 = vmatpush1.msra.mxu0 0.0
    %200 = vmatprep.subr.mxu0 0.0
    %201 = vmatpush1.msra.mxu0 0.0
    %202 = vmatprep.subr.mxu0 0.0
    %203 = vmatpush1.msra.mxu0 0.0
    %204 = vmatprep.subr.mxu0 0.0
    %205 = vmatpush1.msra.mxu0 0.0
    %206 = vmatprep.subr.mxu0 0.0
    %207 = vmatpush1.msra.mxu0 0.0
    %208 = vmatprep.subr.mxu0 0.0
    %209 = vmatpush1.msra.mxu0 0.0
    %210 = vmatprep.subr.mxu0 0.0
    %211 = vmatpush1.msra.mxu0 0.0
    %212 = vmatprep.subr.mxu0 0.0
    %213 = vmatpush1.msra.mxu0 0.0
    %214 = vmatprep.subr.mxu0 0.0
    %215 = vmatpush1.msra.mxu0 0.0
    %216 = vmatprep.subr.mxu0 0.0
    %217 = vmatpush1.msra.mxu0 0.0
    %218 = vmatprep.mubr.f32.mxu0 0.0
    %219 = vmatmul.mubr.f32.gmra.mrb[0].mxu0 %v152
    %v220 = vpop.f32.mrb[0].mxu0
    %v221 = vadd.f32 %v149, %v220
    %v222 = vpop.f32.mrb[0].mxu0
    %223 = vdwg.mxu0
    %v224 = vlaneseq
    %v225 = vshrl.u32 %v224, 7
    %v226 = vlaneseq
    %v227 = vand.u32 %v226, 127
    %v228 = vand.u32 %v225, 1
    %v229 = vand.u32 %v227, 1
    %vm230 = vcmp.eq.s32.totalorder %v228, %v229
    %v231 = vld [vmem:[%s3] sm:$0xff]
    %v232 = vld [vmem:[%s3 + $0x8] sm:$0xff]
    %v233 = vld [vmem:[%s3 + $0x10] sm:$0xff]
    %v234 = vld [vmem:[%s3 + $0x18] sm:$0xff]
    %236 = vrot.lane.b32.xlu0 %v221, 96
    %v237 = vpop.permute.xlu0 %236
    %vm238 = vcmask 64512
    %v239 = vsel %vm238, %v221, 0
    %v241 = vsel %vm238, %v237, 0
    %243 = vmatprep.subr.mxu0 0.0
    %244 = vmatpush1.xpose.msra.mxu0 %v241
    %245 = vmatprep.subr.mxu0 0.0
    %246 = vmatpush1.xpose.msra.mxu0 0.0
    %247 = vmatprep.subr.mxu0 0.0
    %248 = vmatpush1.xpose.msra.mxu0 0.0
    %249 = vmatprep.subr.mxu0 0.0
    %250 = vmatpush1.xpose.msra.mxu0 0.0
    %251 = vmatprep.subr.mxu0 0.0
    %252 = vmatpush1.xpose.msra.mxu0 0.0
    %253 = vmatprep.subr.mxu0 0.0
    %254 = vmatpush1.xpose.msra.mxu0 0.0
    %255 = vmatprep.subr.mxu0 0.0
    %256 = vmatpush1.xpose.msra.mxu0 0.0
    %257 = vmatprep.subr.mxu0 0.0
    %258 = vmatpush1.xpose.msra.mxu0 0.0
    %259 = vmatprep.subr.mxu0 0.0
    %260 = vmatpush1.xpose.msra.mxu0 0.0
    %261 = vmatprep.subr.mxu0 0.0
    %262 = vmatpush1.xpose.msra.mxu0 0.0
    %263 = vmatprep.subr.mxu0 0.0
    %264 = vmatpush1.xpose.msra.mxu0 0.0
    %265 = vmatprep.subr.mxu0 0.0
    %266 = vmatpush1.xpose.msra.mxu0 0.0
    %267 = vmatprep.subr.mxu0 0.0
    %268 = vmatpush1.xpose.msra.mxu0 0.0
    %269 = vmatprep.subr.mxu0 0.0
    %270 = vmatpush1.xpose.msra.mxu0 0.0
    %271 = vmatprep.subr.mxu0 0.0
    %272 = vmatpush1.xpose.msra.mxu0 0.0
    %273 = vmatprep.subr.mxu0 0.0
    %274 = vmatpush1.xpose.msra.mxu0 0.0
    %275 = vmatprep.subr.mxu0 0.0
    %276 = vmatpush1.xpose.msra.mxu0 0.0
    %277 = vmatprep.subr.mxu0 0.0
    %278 = vmatpush1.xpose.msra.mxu0 0.0
    %279 = vmatprep.subr.mxu0 0.0
    %280 = vmatpush1.xpose.msra.mxu0 0.0
    %281 = vmatprep.subr.mxu0 0.0
    %282 = vmatpush1.xpose.msra.mxu0 0.0
    %283 = vmatprep.subr.mxu0 0.0
    %284 = vmatpush1.xpose.msra.mxu0 0.0
    %285 = vmatprep.subr.mxu0 0.0
    %286 = vmatpush1.xpose.msra.mxu0 0.0
    %287 = vmatprep.subr.mxu0 0.0
    %288 = vmatpush1.xpose.msra.mxu0 0.0
    %289 = vmatprep.subr.mxu0 0.0
    %290 = vmatpush1.xpose.msra.mxu0 0.0
    %291 = vmatprep.subr.mxu0 0.0
    %292 = vmatpush1.xpose.msra.mxu0 0.0
    %293 = vmatprep.subr.mxu0 0.0
    %294 = vmatpush1.xpose.msra.mxu0 0.0
    %295 = vmatprep.subr.mxu0 0.0
    %296 = vmatpush1.xpose.msra.mxu0 0.0
    %297 = vmatprep.subr.mxu0 0.0
    %298 = vmatpush1.xpose.msra.mxu0 0.0
    %299 = vmatprep.subr.mxu0 0.0
    %300 = vmatpush1.xpose.msra.mxu0 0.0
    %301 = vmatprep.subr.mxu0 0.0
    %302 = vmatpush1.xpose.msra.mxu0 0.0
    %303 = vmatprep.subr.mxu0 0.0
    %304 = vmatpush1.xpose.msra.mxu0 0.0
    %305 = vmatprep.subr.mxu0 0.0
    %306 = vmatpush1.xpose.msra.mxu0 0.0
    %307 = vmatprep.mubr.f32.mxu0 0.0
    %308 = vmatmul.mubr.f32.gmra.mrb[0].mxu0 %v239
    %v309 = vpop.f32.mrb[0].mxu0
    %v310 = vadd.f32 0.0, %v309
    %v311 = vpop.f32.mrb[0].mxu0
    %312 = vdwg.mxu0
    %v313 = vsel %vm230, %v310, -1e+30
    %v314 = vsel %vm238, %v313, -inf
    %315 = vmax.xlane.f32.xlu0 %v314
    %v316 = vpop.xlane.xlu0 %315
    %v317 = vsub.f32 %v313, %v316
    %v318 = vmul.f32 %v317, 1.442695
    %v319 = vpow.pop %v318
    %v320 = vsel %vm238, %v319, 0.0
    %321 = vadd.xlane.f32.xlu0 %v320
    %v322 = vpop.xlane.xlu0 %321
    %v323 = vrcp.pop %v322
    %v324 = vmul.f32 %v319, %v323
    %325 = vrot.lane.b32.xlu0 %v221, 64
    %v326 = vpop.permute.xlu0 %325
    %v329 = vsel %vm238, %v324, 0
    %331 = vmatprep.subr.mxu0 0.0
    %332 = vmatpush1.msra.mxu0 %v326
    %333 = vmatprep.subr.mxu0 0.0
    %334 = vmatpush1.msra.mxu0 0.0
    %335 = vmatprep.subr.mxu0 0.0
    %336 = vmatpush1.msra.mxu0 0.0
    %337 = vmatprep.subr.mxu0 0.0
    %338 = vmatpush1.msra.mxu0 0.0
    %339 = vmatprep.subr.mxu0 0.0
    %340 = vmatpush1.msra.mxu0 0.0
    %341 = vmatprep.subr.mxu0 0.0
    %342 = vmatpush1.msra.mxu0 0.0
    %343 = vmatprep.subr.mxu0 0.0
    %344 = vmatpush1.msra.mxu0 0.0
    %345 = vmatprep.subr.mxu0 0.0
    %346 = vmatpush1.msra.mxu0 0.0
    %347 = vmatprep.subr.mxu0 0.0
    %348 = vmatpush1.msra.mxu0 0.0
    %349 = vmatprep.subr.mxu0 0.0
    %350 = vmatpush1.msra.mxu0 0.0
    %351 = vmatprep.subr.mxu0 0.0
    %352 = vmatpush1.msra.mxu0 0.0
    %353 = vmatprep.subr.mxu0 0.0
    %354 = vmatpush1.msra.mxu0 0.0
    %355 = vmatprep.subr.mxu0 0.0
    %356 = vmatpush1.msra.mxu0 0.0
    %357 = vmatprep.subr.mxu0 0.0
    %358 = vmatpush1.msra.mxu0 0.0
    %359 = vmatprep.subr.mxu0 0.0
    %360 = vmatpush1.msra.mxu0 0.0
    %361 = vmatprep.subr.mxu0 0.0
    %362 = vmatpush1.msra.mxu0 0.0
    %363 = vmatprep.subr.mxu0 0.0
    %364 = vmatpush1.msra.mxu0 0.0
    %365 = vmatprep.subr.mxu0 0.0
    %366 = vmatpush1.msra.mxu0 0.0
    %367 = vmatprep.subr.mxu0 0.0
    %368 = vmatpush1.msra.mxu0 0.0
    %369 = vmatprep.subr.mxu0 0.0
    %370 = vmatpush1.msra.mxu0 0.0
    %371 = vmatprep.subr.mxu0 0.0
    %372 = vmatpush1.msra.mxu0 0.0
    %373 = vmatprep.subr.mxu0 0.0
    %374 = vmatpush1.msra.mxu0 0.0
    %375 = vmatprep.subr.mxu0 0.0
    %376 = vmatpush1.msra.mxu0 0.0
    %377 = vmatprep.subr.mxu0 0.0
    %378 = vmatpush1.msra.mxu0 0.0
    %379 = vmatprep.subr.mxu0 0.0
    %380 = vmatpush1.msra.mxu0 0.0
    %381 = vmatprep.subr.mxu0 0.0
    %382 = vmatpush1.msra.mxu0 0.0
    %383 = vmatprep.subr.mxu0 0.0
    %384 = vmatpush1.msra.mxu0 0.0
    %385 = vmatprep.subr.mxu0 0.0
    %386 = vmatpush1.msra.mxu0 0.0
    %387 = vmatprep.subr.mxu0 0.0
    %388 = vmatpush1.msra.mxu0 0.0
    %389 = vmatprep.subr.mxu0 0.0
    %390 = vmatpush1.msra.mxu0 0.0
    %391 = vmatprep.subr.mxu0 0.0
    %392 = vmatpush1.msra.mxu0 0.0
    %393 = vmatprep.subr.mxu0 0.0
    %394 = vmatpush1.msra.mxu0 0.0
    %395 = vmatprep.mubr.f32.mxu0 0.0
    %396 = vmatmul.mubr.f32.gmra.mrb[0].mxu0 %v329
    %v397 = vpop.f32.mrb[0].mxu0
    %v398 = vadd.f32 0.0, %v397
    %v399 = vpop.f32.mrb[0].mxu0
    %400 = vdwg.mxu0
    %401 = vrot.lane.b32.xlu0 %v221, 120
    %v402 = vpop.permute.xlu0 %401
    %403 = vrot.lane.b32.xlu0 %v221, 88
    %v404 = vpop.permute.xlu0 %403
    %v405 = vsel %vm238, %v402, 0
    %v407 = vsel %vm238, %v404, 0
    %409 = vmatprep.subr.mxu0 0.0
    %410 = vmatpush1.xpose.msra.mxu0 %v407
    %411 = vmatprep.subr.mxu0 0.0
    %412 = vmatpush1.xpose.msra.mxu0 0.0
    %413 = vmatprep.subr.mxu0 0.0
    %414 = vmatpush1.xpose.msra.mxu0 0.0
    %415 = vmatprep.subr.mxu0 0.0
    %416 = vmatpush1.xpose.msra.mxu0 0.0
    %417 = vmatprep.subr.mxu0 0.0
    %418 = vmatpush1.xpose.msra.mxu0 0.0
    %419 = vmatprep.subr.mxu0 0.0
    %420 = vmatpush1.xpose.msra.mxu0 0.0
    %421 = vmatprep.subr.mxu0 0.0
    %422 = vmatpush1.xpose.msra.mxu0 0.0
    %423 = vmatprep.subr.mxu0 0.0
    %424 = vmatpush1.xpose.msra.mxu0 0.0
    %425 = vmatprep.subr.mxu0 0.0
    %426 = vmatpush1.xpose.msra.mxu0 0.0
    %427 = vmatprep.subr.mxu0 0.0
    %428 = vmatpush1.xpose.msra.mxu0 0.0
    %429 = vmatprep.subr.mxu0 0.0
    %430 = vmatpush1.xpose.msra.mxu0 0.0
    %431 = vmatprep.subr.mxu0 0.0
    %432 = vmatpush1.xpose.msra.mxu0 0.0
    %433 = vmatprep.subr.mxu0 0.0
    %434 = vmatpush1.xpose.msra.mxu0 0.0
    %435 = vmatprep.subr.mxu0 0.0
    %436 = vmatpush1.xpose.msra.mxu0 0.0
    %437 = vmatprep.subr.mxu0 0.0
    %438 = vmatpush1.xpose.msra.mxu0 0.0
    %439 = vmatprep.subr.mxu0 0.0
    %440 = vmatpush1.xpose.msra.mxu0 0.0
    %441 = vmatprep.subr.mxu0 0.0
    %442 = vmatpush1.xpose.msra.mxu0 0.0
    %443 = vmatprep.subr.mxu0 0.0
    %444 = vmatpush1.xpose.msra.mxu0 0.0
    %445 = vmatprep.subr.mxu0 0.0
    %446 = vmatpush1.xpose.msra.mxu0 0.0
    %447 = vmatprep.subr.mxu0 0.0
    %448 = vmatpush1.xpose.msra.mxu0 0.0
    %449 = vmatprep.subr.mxu0 0.0
    %450 = vmatpush1.xpose.msra.mxu0 0.0
    %451 = vmatprep.subr.mxu0 0.0
    %452 = vmatpush1.xpose.msra.mxu0 0.0
    %453 = vmatprep.subr.mxu0 0.0
    %454 = vmatpush1.xpose.msra.mxu0 0.0
    %455 = vmatprep.subr.mxu0 0.0
    %456 = vmatpush1.xpose.msra.mxu0 0.0
    %457 = vmatprep.subr.mxu0 0.0
    %458 = vmatpush1.xpose.msra.mxu0 0.0
    %459 = vmatprep.subr.mxu0 0.0
    %460 = vmatpush1.xpose.msra.mxu0 0.0
    %461 = vmatprep.subr.mxu0 0.0
    %462 = vmatpush1.xpose.msra.mxu0 0.0
    %463 = vmatprep.subr.mxu0 0.0
    %464 = vmatpush1.xpose.msra.mxu0 0.0
    %465 = vmatprep.subr.mxu0 0.0
    %466 = vmatpush1.xpose.msra.mxu0 0.0
    %467 = vmatprep.subr.mxu0 0.0
    %468 = vmatpush1.xpose.msra.mxu0 0.0
    %469 = vmatprep.subr.mxu0 0.0
    %470 = vmatpush1.xpose.msra.mxu0 0.0
    %471 = vmatprep.subr.mxu0 0.0
    %472 = vmatpush1.xpose.msra.mxu0 0.0
    %473 = vmatprep.mubr.f32.mxu0 0.0
    %474 = vmatmul.mubr.f32.gmra.mrb[0].mxu0 %v405
    %v475 = vpop.f32.mrb[0].mxu0
    %v476 = vadd.f32 0.0, %v475
    %v477 = vpop.f32.mrb[0].mxu0
    %478 = vdwg.mxu0
    %v479 = vsel %vm230, %v476, -1e+30
    %v480 = vsel %vm238, %v479, -inf
    %481 = vmax.xlane.f32.xlu0 %v480
    %v482 = vpop.xlane.xlu0 %481
    %v483 = vsub.f32 %v479, %v482
    %v484 = vmul.f32 %v483, 1.442695
    %v485 = vpow.pop %v484
    %v486 = vsel %vm238, %v485, 0.0
    %487 = vadd.xlane.f32.xlu0 %v486
    %v488 = vpop.xlane.xlu0 %487
    %v489 = vrcp.pop %v488
    %v490 = vmul.f32 %v485, %v489
    %491 = vrot.lane.b32.xlu0 %v221, 56
    %v492 = vpop.permute.xlu0 %491
    %v495 = vsel %vm238, %v490, 0
    %497 = vmatprep.subr.mxu0 0.0
    %498 = vmatpush1.msra.mxu0 %v492
    %499 = vmatprep.subr.mxu0 0.0
    %500 = vmatpush1.msra.mxu0 0.0
    %501 = vmatprep.subr.mxu0 0.0
    %502 = vmatpush1.msra.mxu0 0.0
    %503 = vmatprep.subr.mxu0 0.0
    %504 = vmatpush1.msra.mxu0 0.0
    %505 = vmatprep.subr.mxu0 0.0
    %506 = vmatpush1.msra.mxu0 0.0
    %507 = vmatprep.subr.mxu0 0.0
    %508 = vmatpush1.msra.mxu0 0.0
    %509 = vmatprep.subr.mxu0 0.0
    %510 = vmatpush1.msra.mxu0 0.0
    %511 = vmatprep.subr.mxu0 0.0
    %512 = vmatpush1.msra.mxu0 0.0
    %513 = vmatprep.subr.mxu0 0.0
    %514 = vmatpush1.msra.mxu0 0.0
    %515 = vmatprep.subr.mxu0 0.0
    %516 = vmatpush1.msra.mxu0 0.0
    %517 = vmatprep.subr.mxu0 0.0
    %518 = vmatpush1.msra.mxu0 0.0
    %519 = vmatprep.subr.mxu0 0.0
    %520 = vmatpush1.msra.mxu0 0.0
    %521 = vmatprep.subr.mxu0 0.0
    %522 = vmatpush1.msra.mxu0 0.0
    %523 = vmatprep.subr.mxu0 0.0
    %524 = vmatpush1.msra.mxu0 0.0
    %525 = vmatprep.subr.mxu0 0.0
    %526 = vmatpush1.msra.mxu0 0.0
    %527 = vmatprep.subr.mxu0 0.0
    %528 = vmatpush1.msra.mxu0 0.0
    %529 = vmatprep.subr.mxu0 0.0
    %530 = vmatpush1.msra.mxu0 0.0
    %531 = vmatprep.subr.mxu0 0.0
    %532 = vmatpush1.msra.mxu0 0.0
    %533 = vmatprep.subr.mxu0 0.0
    %534 = vmatpush1.msra.mxu0 0.0
    %535 = vmatprep.subr.mxu0 0.0
    %536 = vmatpush1.msra.mxu0 0.0
    %537 = vmatprep.subr.mxu0 0.0
    %538 = vmatpush1.msra.mxu0 0.0
    %539 = vmatprep.subr.mxu0 0.0
    %540 = vmatpush1.msra.mxu0 0.0
    %541 = vmatprep.subr.mxu0 0.0
    %542 = vmatpush1.msra.mxu0 0.0
    %543 = vmatprep.subr.mxu0 0.0
    %544 = vmatpush1.msra.mxu0 0.0
    %545 = vmatprep.subr.mxu0 0.0
    %546 = vmatpush1.msra.mxu0 0.0
    %547 = vmatprep.subr.mxu0 0.0
    %548 = vmatpush1.msra.mxu0 0.0
    %549 = vmatprep.subr.mxu0 0.0
    %550 = vmatpush1.msra.mxu0 0.0
    %551 = vmatprep.subr.mxu0 0.0
    %552 = vmatpush1.msra.mxu0 0.0
    %553 = vmatprep.subr.mxu0 0.0
    %554 = vmatpush1.msra.mxu0 0.0
    %555 = vmatprep.subr.mxu0 0.0
    %556 = vmatpush1.msra.mxu0 0.0
    %557 = vmatprep.subr.mxu0 0.0
    %558 = vmatpush1.msra.mxu0 0.0
    %559 = vmatprep.subr.mxu0 0.0
    %560 = vmatpush1.msra.mxu0 0.0
    %561 = vmatprep.mubr.f32.mxu0 0.0
    %562 = vmatmul.mubr.f32.gmra.mrb[0].mxu0 %v495
    %v563 = vpop.f32.mrb[0].mxu0
    %v564 = vadd.f32 0.0, %v563
    %v565 = vpop.f32.mrb[0].mxu0
    %566 = vdwg.mxu0
    %567 = vrot.lane.b32.xlu0 %v221, 112
    %v568 = vpop.permute.xlu0 %567
    %569 = vrot.lane.b32.xlu0 %v221, 80
    %v570 = vpop.permute.xlu0 %569
    %v571 = vsel %vm238, %v568, 0
    %v573 = vsel %vm238, %v570, 0
    %575 = vmatprep.subr.mxu0 0.0
    %576 = vmatpush1.xpose.msra.mxu0 %v573
    %577 = vmatprep.subr.mxu0 0.0
    %578 = vmatpush1.xpose.msra.mxu0 0.0
    %579 = vmatprep.subr.mxu0 0.0
    %580 = vmatpush1.xpose.msra.mxu0 0.0
    %581 = vmatprep.subr.mxu0 0.0
    %582 = vmatpush1.xpose.msra.mxu0 0.0
    %583 = vmatprep.subr.mxu0 0.0
    %584 = vmatpush1.xpose.msra.mxu0 0.0
    %585 = vmatprep.subr.mxu0 0.0
    %586 = vmatpush1.xpose.msra.mxu0 0.0
    %587 = vmatprep.subr.mxu0 0.0
    %588 = vmatpush1.xpose.msra.mxu0 0.0
    %589 = vmatprep.subr.mxu0 0.0
    %590 = vmatpush1.xpose.msra.mxu0 0.0
    %591 = vmatprep.subr.mxu0 0.0
    %592 = vmatpush1.xpose.msra.mxu0 0.0
    %593 = vmatprep.subr.mxu0 0.0
    %594 = vmatpush1.xpose.msra.mxu0 0.0
    %595 = vmatprep.subr.mxu0 0.0
    %596 = vmatpush1.xpose.msra.mxu0 0.0
    %597 = vmatprep.subr.mxu0 0.0
    %598 = vmatpush1.xpose.msra.mxu0 0.0
    %599 = vmatprep.subr.mxu0 0.0
    %600 = vmatpush1.xpose.msra.mxu0 0.0
    %601 = vmatprep.subr.mxu0 0.0
    %602 = vmatpush1.xpose.msra.mxu0 0.0
    %603 = vmatprep.subr.mxu0 0.0
    %604 = vmatpush1.xpose.msra.mxu0 0.0
    %605 = vmatprep.subr.mxu0 0.0
    %606 = vmatpush1.xpose.msra.mxu0 0.0
    %607 = vmatprep.subr.mxu0 0.0
    %608 = vmatpush1.xpose.msra.mxu0 0.0
    %609 = vmatprep.subr.mxu0 0.0
    %610 = vmatpush1.xpose.msra.mxu0 0.0
    %611 = vmatprep.subr.mxu0 0.0
    %612 = vmatpush1.xpose.msra.mxu0 0.0
    %613 = vmatprep.subr.mxu0 0.0
    %614 = vmatpush1.xpose.msra.mxu0 0.0
    %615 = vmatprep.subr.mxu0 0.0
    %616 = vmatpush1.xpose.msra.mxu0 0.0
    %617 = vmatprep.subr.mxu0 0.0
    %618 = vmatpush1.xpose.msra.mxu0 0.0
    %619 = vmatprep.subr.mxu0 0.0
    %620 = vmatpush1.xpose.msra.mxu0 0.0
    %621 = vmatprep.subr.mxu0 0.0
    %622 = vmatpush1.xpose.msra.mxu0 0.0
    %623 = vmatprep.subr.mxu0 0.0
    %624 = vmatpush1.xpose.msra.mxu0 0.0
    %625 = vmatprep.subr.mxu0 0.0
    %626 = vmatpush1.xpose.msra.mxu0 0.0
    %627 = vmatprep.subr.mxu0 0.0
    %628 = vmatpush1.xpose.msra.mxu0 0.0
    %629 = vmatprep.subr.mxu0 0.0
    %630 = vmatpush1.xpose.msra.mxu0 0.0
    %631 = vmatprep.subr.mxu0 0.0
    %632 = vmatpush1.xpose.msra.mxu0 0.0
    %633 = vmatprep.subr.mxu0 0.0
    %634 = vmatpush1.xpose.msra.mxu0 0.0
    %635 = vmatprep.subr.mxu0 0.0
    %636 = vmatpush1.xpose.msra.mxu0 0.0
    %637 = vmatprep.subr.mxu0 0.0
    %638 = vmatpush1.xpose.msra.mxu0 0.0
    %639 = vmatprep.mubr.f32.mxu0 0.0
    %640 = vmatmul.mubr.f32.gmra.mrb[0].mxu0 %v571
    %v641 = vpop.f32.mrb[0].mxu0
    %v642 = vadd.f32 0.0, %v641
    %v643 = vpop.f32.mrb[0].mxu0
    %644 = vdwg.mxu0
    %v645 = vsel %vm230, %v642, -1e+30
    %v646 = vsel %vm238, %v645, -inf
    %647 = vmax.xlane.f32.xlu0 %v646
    %v648 = vpop.xlane.xlu0 %647
    %v649 = vsub.f32 %v645, %v648
    %v650 = vmul.f32 %v649, 1.442695
    %v651 = vpow.pop %v650
    %v652 = vsel %vm238, %v651, 0.0
    %653 = vadd.xlane.f32.xlu0 %v652
    %v654 = vpop.xlane.xlu0 %653
    %v655 = vrcp.pop %v654
    %v656 = vmul.f32 %v651, %v655
    %657 = vrot.lane.b32.xlu0 %v221, 48
    %v658 = vpop.permute.xlu0 %657
    %v661 = vsel %vm238, %v656, 0
    %663 = vmatprep.subr.mxu0 0.0
    %664 = vmatpush1.msra.mxu0 %v658
    %665 = vmatprep.subr.mxu0 0.0
    %666 = vmatpush1.msra.mxu0 0.0
    %667 = vmatprep.subr.mxu0 0.0
    %668 = vmatpush1.msra.mxu0 0.0
    %669 = vmatprep.subr.mxu0 0.0
    %670 = vmatpush1.msra.mxu0 0.0
    %671 = vmatprep.subr.mxu0 0.0
    %672 = vmatpush1.msra.mxu0 0.0
    %673 = vmatprep.subr.mxu0 0.0
    %674 = vmatpush1.msra.mxu0 0.0
    %675 = vmatprep.subr.mxu0 0.0
    %676 = vmatpush1.msra.mxu0 0.0
    %677 = vmatprep.subr.mxu0 0.0
    %678 = vmatpush1.msra.mxu0 0.0
    %679 = vmatprep.subr.mxu0 0.0
    %680 = vmatpush1.msra.mxu0 0.0
    %681 = vmatprep.subr.mxu0 0.0
    %682 = vmatpush1.msra.mxu0 0.0
    %683 = vmatprep.subr.mxu0 0.0
    %684 = vmatpush1.msra.mxu0 0.0
    %685 = vmatprep.subr.mxu0 0.0
    %686 = vmatpush1.msra.mxu0 0.0
    %687 = vmatprep.subr.mxu0 0.0
    %688 = vmatpush1.msra.mxu0 0.0
    %689 = vmatprep.subr.mxu0 0.0
    %690 = vmatpush1.msra.mxu0 0.0
    %691 = vmatprep.subr.mxu0 0.0
    %692 = vmatpush1.msra.mxu0 0.0
    %693 = vmatprep.subr.mxu0 0.0
    %694 = vmatpush1.msra.mxu0 0.0
    %695 = vmatprep.subr.mxu0 0.0
    %696 = vmatpush1.msra.mxu0 0.0
    %697 = vmatprep.subr.mxu0 0.0
    %698 = vmatpush1.msra.mxu0 0.0
    %699 = vmatprep.subr.mxu0 0.0
    %700 = vmatpush1.msra.mxu0 0.0
    %701 = vmatprep.subr.mxu0 0.0
    %702 = vmatpush1.msra.mxu0 0.0
    %703 = vmatprep.subr.mxu0 0.0
    %704 = vmatpush1.msra.mxu0 0.0
    %705 = vmatprep.subr.mxu0 0.0
    %706 = vmatpush1.msra.mxu0 0.0
    %707 = vmatprep.subr.mxu0 0.0
    %708 = vmatpush1.msra.mxu0 0.0
    %709 = vmatprep.subr.mxu0 0.0
    %710 = vmatpush1.msra.mxu0 0.0
    %711 = vmatprep.subr.mxu0 0.0
    %712 = vmatpush1.msra.mxu0 0.0
    %713 = vmatprep.subr.mxu0 0.0
    %714 = vmatpush1.msra.mxu0 0.0
    %715 = vmatprep.subr.mxu0 0.0
    %716 = vmatpush1.msra.mxu0 0.0
    %717 = vmatprep.subr.mxu0 0.0
    %718 = vmatpush1.msra.mxu0 0.0
    %719 = vmatprep.subr.mxu0 0.0
    %720 = vmatpush1.msra.mxu0 0.0
    %721 = vmatprep.subr.mxu0 0.0
    %722 = vmatpush1.msra.mxu0 0.0
    %723 = vmatprep.subr.mxu0 0.0
    %724 = vmatpush1.msra.mxu0 0.0
    %725 = vmatprep.subr.mxu0 0.0
    %726 = vmatpush1.msra.mxu0 0.0
    %727 = vmatprep.mubr.f32.mxu0 0.0
    %728 = vmatmul.mubr.f32.gmra.mrb[0].mxu0 %v661
    %v729 = vpop.f32.mrb[0].mxu0
    %v730 = vadd.f32 0.0, %v729
    %v731 = vpop.f32.mrb[0].mxu0
    %732 = vdwg.mxu0
    %733 = vrot.lane.b32.xlu0 %v221, 104
    %v734 = vpop.permute.xlu0 %733
    %735 = vrot.lane.b32.xlu0 %v221, 72
    %v736 = vpop.permute.xlu0 %735
    %v737 = vsel %vm238, %v734, 0
    %v739 = vsel %vm238, %v736, 0
    %741 = vmatprep.subr.mxu0 0.0
    %742 = vmatpush1.xpose.msra.mxu0 %v739
    %743 = vmatprep.subr.mxu0 0.0
    %744 = vmatpush1.xpose.msra.mxu0 0.0
    %745 = vmatprep.subr.mxu0 0.0
    %746 = vmatpush1.xpose.msra.mxu0 0.0
    %747 = vmatprep.subr.mxu0 0.0
    %748 = vmatpush1.xpose.msra.mxu0 0.0
    %749 = vmatprep.subr.mxu0 0.0
    %750 = vmatpush1.xpose.msra.mxu0 0.0
    %751 = vmatprep.subr.mxu0 0.0
    %752 = vmatpush1.xpose.msra.mxu0 0.0
    %753 = vmatprep.subr.mxu0 0.0
    %754 = vmatpush1.xpose.msra.mxu0 0.0
    %755 = vmatprep.subr.mxu0 0.0
    %756 = vmatpush1.xpose.msra.mxu0 0.0
    %757 = vmatprep.subr.mxu0 0.0
    %758 = vmatpush1.xpose.msra.mxu0 0.0
    %759 = vmatprep.subr.mxu0 0.0
    %760 = vmatpush1.xpose.msra.mxu0 0.0
    %761 = vmatprep.subr.mxu0 0.0
    %762 = vmatpush1.xpose.msra.mxu0 0.0
    %763 = vmatprep.subr.mxu0 0.0
    %764 = vmatpush1.xpose.msra.mxu0 0.0
    %765 = vmatprep.subr.mxu0 0.0
    %766 = vmatpush1.xpose.msra.mxu0 0.0
    %767 = vmatprep.subr.mxu0 0.0
    %768 = vmatpush1.xpose.msra.mxu0 0.0
    %769 = vmatprep.subr.mxu0 0.0
    %770 = vmatpush1.xpose.msra.mxu0 0.0
    %771 = vmatprep.subr.mxu0 0.0
    %772 = vmatpush1.xpose.msra.mxu0 0.0
    %773 = vmatprep.subr.mxu0 0.0
    %774 = vmatpush1.xpose.msra.mxu0 0.0
    %775 = vmatprep.subr.mxu0 0.0
    %776 = vmatpush1.xpose.msra.mxu0 0.0
    %777 = vmatprep.subr.mxu0 0.0
    %778 = vmatpush1.xpose.msra.mxu0 0.0
    %779 = vmatprep.subr.mxu0 0.0
    %780 = vmatpush1.xpose.msra.mxu0 0.0
    %781 = vmatprep.subr.mxu0 0.0
    %782 = vmatpush1.xpose.msra.mxu0 0.0
    %783 = vmatprep.subr.mxu0 0.0
    %784 = vmatpush1.xpose.msra.mxu0 0.0
    %785 = vmatprep.subr.mxu0 0.0
    %786 = vmatpush1.xpose.msra.mxu0 0.0
    %787 = vmatprep.subr.mxu0 0.0
    %788 = vmatpush1.xpose.msra.mxu0 0.0
    %789 = vmatprep.subr.mxu0 0.0
    %790 = vmatpush1.xpose.msra.mxu0 0.0
    %791 = vmatprep.subr.mxu0 0.0
    %792 = vmatpush1.xpose.msra.mxu0 0.0
    %793 = vmatprep.subr.mxu0 0.0
    %794 = vmatpush1.xpose.msra.mxu0 0.0
    %795 = vmatprep.subr.mxu0 0.0
    %796 = vmatpush1.xpose.msra.mxu0 0.0
    %797 = vmatprep.subr.mxu0 0.0
    %798 = vmatpush1.xpose.msra.mxu0 0.0
    %799 = vmatprep.subr.mxu0 0.0
    %800 = vmatpush1.xpose.msra.mxu0 0.0
    %801 = vmatprep.subr.mxu0 0.0
    %802 = vmatpush1.xpose.msra.mxu0 0.0
    %803 = vmatprep.subr.mxu0 0.0
    %804 = vmatpush1.xpose.msra.mxu0 0.0
    %805 = vmatprep.mubr.f32.mxu0 0.0
    %806 = vmatmul.mubr.f32.gmra.mrb[0].mxu0 %v737
    %v807 = vpop.f32.mrb[0].mxu0
    %v808 = vadd.f32 0.0, %v807
    %v809 = vpop.f32.mrb[0].mxu0
    %810 = vdwg.mxu0
    %v811 = vsel %vm230, %v808, -1e+30
    %v812 = vsel %vm238, %v811, -inf
    %813 = vmax.xlane.f32.xlu0 %v812
    %v814 = vpop.xlane.xlu0 %813
    %v815 = vsub.f32 %v811, %v814
    %v816 = vmul.f32 %v815, 1.442695
    %v817 = vpow.pop %v816
    %v818 = vsel %vm238, %v817, 0.0
    %819 = vadd.xlane.f32.xlu0 %v818
    %v820 = vpop.xlane.xlu0 %819
    %v821 = vrcp.pop %v820
    %v822 = vmul.f32 %v817, %v821
    %823 = vrot.lane.b32.xlu0 %v221, 40
    %v824 = vpop.permute.xlu0 %823
    %v827 = vsel %vm238, %v822, 0
    %829 = vmatprep.subr.mxu0 0.0
    %830 = vmatpush1.msra.mxu0 %v824
    %831 = vmatprep.subr.mxu0 0.0
    %832 = vmatpush1.msra.mxu0 0.0
    %833 = vmatprep.subr.mxu0 0.0
    %834 = vmatpush1.msra.mxu0 0.0
    %835 = vmatprep.subr.mxu0 0.0
    %836 = vmatpush1.msra.mxu0 0.0
    %837 = vmatprep.subr.mxu0 0.0
    %838 = vmatpush1.msra.mxu0 0.0
    %839 = vmatprep.subr.mxu0 0.0
    %840 = vmatpush1.msra.mxu0 0.0
    %841 = vmatprep.subr.mxu0 0.0
    %842 = vmatpush1.msra.mxu0 0.0
    %843 = vmatprep.subr.mxu0 0.0
    %844 = vmatpush1.msra.mxu0 0.0
    %845 = vmatprep.subr.mxu0 0.0
    %846 = vmatpush1.msra.mxu0 0.0
    %847 = vmatprep.subr.mxu0 0.0
    %848 = vmatpush1.msra.mxu0 0.0
    %849 = vmatprep.subr.mxu0 0.0
    %850 = vmatpush1.msra.mxu0 0.0
    %851 = vmatprep.subr.mxu0 0.0
    %852 = vmatpush1.msra.mxu0 0.0
    %853 = vmatprep.subr.mxu0 0.0
    %854 = vmatpush1.msra.mxu0 0.0
    %855 = vmatprep.subr.mxu0 0.0
    %856 = vmatpush1.msra.mxu0 0.0
    %857 = vmatprep.subr.mxu0 0.0
    %858 = vmatpush1.msra.mxu0 0.0
    %859 = vmatprep.subr.mxu0 0.0
    %860 = vmatpush1.msra.mxu0 0.0
    %861 = vmatprep.subr.mxu0 0.0
    %862 = vmatpush1.msra.mxu0 0.0
    %863 = vmatprep.subr.mxu0 0.0
    %864 = vmatpush1.msra.mxu0 0.0
    %865 = vmatprep.subr.mxu0 0.0
    %866 = vmatpush1.msra.mxu0 0.0
    %867 = vmatprep.subr.mxu0 0.0
    %868 = vmatpush1.msra.mxu0 0.0
    %869 = vmatprep.subr.mxu0 0.0
    %870 = vmatpush1.msra.mxu0 0.0
    %871 = vmatprep.subr.mxu0 0.0
    %872 = vmatpush1.msra.mxu0 0.0
    %873 = vmatprep.subr.mxu0 0.0
    %874 = vmatpush1.msra.mxu0 0.0
    %875 = vmatprep.subr.mxu0 0.0
    %876 = vmatpush1.msra.mxu0 0.0
    %877 = vmatprep.subr.mxu0 0.0
    %878 = vmatpush1.msra.mxu0 0.0
    %879 = vmatprep.subr.mxu0 0.0
    %880 = vmatpush1.msra.mxu0 0.0
    %881 = vmatprep.subr.mxu0 0.0
    %882 = vmatpush1.msra.mxu0 0.0
    %883 = vmatprep.subr.mxu0 0.0
    %884 = vmatpush1.msra.mxu0 0.0
    %885 = vmatprep.subr.mxu0 0.0
    %886 = vmatpush1.msra.mxu0 0.0
    %887 = vmatprep.subr.mxu0 0.0
    %888 = vmatpush1.msra.mxu0 0.0
    %889 = vmatprep.subr.mxu0 0.0
    %890 = vmatpush1.msra.mxu0 0.0
    %891 = vmatprep.subr.mxu0 0.0
    %892 = vmatpush1.msra.mxu0 0.0
    %893 = vmatprep.mubr.f32.mxu0 0.0
    %894 = vmatmul.mubr.f32.gmra.mrb[0].mxu0 %v827
    %v895 = vpop.f32.mrb[0].mxu0
    %v896 = vadd.f32 0.0, %v895
    %v897 = vpop.f32.mrb[0].mxu0
    %898 = vdwg.mxu0
    %900 = vrot.lane.b32.xlu0 %v564, 8
    %v901 = vpop.permute.xlu0 %900
    %904 = vrot.lane.b32.xlu0 %v730, 16
    %v905 = vpop.permute.xlu0 %904
    %908 = vrot.lane.b32.xlu0 %v896, 24
    %v909 = vpop.permute.xlu0 %908
    %v911 = vsel %vm238, %v398, %v901
    %vm912 = vcmask 130048
    %v913 = vsel %vm912, %v911, %v905
    %vm914 = vcmask 195584
    %v915 = vsel %vm914, %v913, %v909
    %v916 = vlaneseq
    %v917 = vshrl.u32 %v916, 7
    %v918 = vsub.s32 1, %v917
    %v919 = vrot.slane %v38, %v918
    %v921 = vsel %vm150, %v915, 0
    %923 = vmatprep.subr.mxu0 0.0
    %924 = vmatpush1.msra.mxu0 %v231
    %925 = vmatprep.subr.mxu0 0.0
    %926 = vmatpush1.msra.mxu0 %v232
    %927 = vmatprep.subr.mxu0 0.0
    %928 = vmatpush1.msra.mxu0 %v233
    %929 = vmatprep.subr.mxu0 0.0
    %930 = vmatpush1.msra.mxu0 %v234
    %931 = vmatprep.subr.mxu0 0.0
    %932 = vmatpush1.msra.mxu0 0.0
    %933 = vmatprep.subr.mxu0 0.0
    %934 = vmatpush1.msra.mxu0 0.0
    %935 = vmatprep.subr.mxu0 0.0
    %936 = vmatpush1.msra.mxu0 0.0
    %937 = vmatprep.subr.mxu0 0.0
    %938 = vmatpush1.msra.mxu0 0.0
    %939 = vmatprep.subr.mxu0 0.0
    %940 = vmatpush1.msra.mxu0 0.0
    %941 = vmatprep.subr.mxu0 0.0
    %942 = vmatpush1.msra.mxu0 0.0
    %943 = vmatprep.subr.mxu0 0.0
    %944 = vmatpush1.msra.mxu0 0.0
    %945 = vmatprep.subr.mxu0 0.0
    %946 = vmatpush1.msra.mxu0 0.0
    %947 = vmatprep.subr.mxu0 0.0
    %948 = vmatpush1.msra.mxu0 0.0
    %949 = vmatprep.subr.mxu0 0.0
    %950 = vmatpush1.msra.mxu0 0.0
    %951 = vmatprep.subr.mxu0 0.0
    %952 = vmatpush1.msra.mxu0 0.0
    %953 = vmatprep.subr.mxu0 0.0
    %954 = vmatpush1.msra.mxu0 0.0
    %955 = vmatprep.subr.mxu0 0.0
    %956 = vmatpush1.msra.mxu0 0.0
    %957 = vmatprep.subr.mxu0 0.0
    %958 = vmatpush1.msra.mxu0 0.0
    %959 = vmatprep.subr.mxu0 0.0
    %960 = vmatpush1.msra.mxu0 0.0
    %961 = vmatprep.subr.mxu0 0.0
    %962 = vmatpush1.msra.mxu0 0.0
    %963 = vmatprep.subr.mxu0 0.0
    %964 = vmatpush1.msra.mxu0 0.0
    %965 = vmatprep.subr.mxu0 0.0
    %966 = vmatpush1.msra.mxu0 0.0
    %967 = vmatprep.subr.mxu0 0.0
    %968 = vmatpush1.msra.mxu0 0.0
    %969 = vmatprep.subr.mxu0 0.0
    %970 = vmatpush1.msra.mxu0 0.0
    %971 = vmatprep.subr.mxu0 0.0
    %972 = vmatpush1.msra.mxu0 0.0
    %973 = vmatprep.subr.mxu0 0.0
    %974 = vmatpush1.msra.mxu0 0.0
    %975 = vmatprep.subr.mxu0 0.0
    %976 = vmatpush1.msra.mxu0 0.0
    %977 = vmatprep.subr.mxu0 0.0
    %978 = vmatpush1.msra.mxu0 0.0
    %979 = vmatprep.subr.mxu0 0.0
    %980 = vmatpush1.msra.mxu0 0.0
    %981 = vmatprep.subr.mxu0 0.0
    %982 = vmatpush1.msra.mxu0 0.0
    %983 = vmatprep.subr.mxu0 0.0
    %984 = vmatpush1.msra.mxu0 0.0
    %985 = vmatprep.subr.mxu0 0.0
    %986 = vmatpush1.msra.mxu0 0.0
    %987 = vmatprep.mubr.f32.mxu0 0.0
    %988 = vmatmul.mubr.f32.gmra.mrb[0].mxu0 %v921
    %v989 = vpop.f32.mrb[0].mxu0
    %v990 = vadd.f32 %v919, %v989
    %v991 = vpop.f32.mrb[0].mxu0
    %992 = vdwg.mxu0
    %v993 = vadd.f32 %v139, %v990
    %v994 = vsel %vm150, %v993, 0.0
    %995 = vadd.xlane.f32.xlu0 %v994
    %v996 = vpop.xlane.xlu0 %995
    %v997 = vrcp.pop 32.0
    %v998 = vmul.f32 %v996, %v997
    %v999 = vsub.f32 %v993, %v998
    %v1000 = vmul.f32 %v999, %v999
    %v1001 = vsel %vm150, %v1000, 0.0
    %1002 = vadd.xlane.f32.xlu0 %v1001
    %v1003 = vpop.xlane.xlu0 %1002
    %v1004 = vmul.f32 %v1003, %v997
    %v1005 = vadd.f32 %v1004, 1e-05
    %v1006 = vrsqrt.pop %v1005
    %v1007 = vmul.f32 %v999, %v1006
    %v1008 = vlaneseq
    %v1009 = vshrl.u32 %v1008, 7
    %v1010 = vsub.s32 2, %v1009
    %v1011 = vrot.slane %v38, %v1010
    %v1012 = vmul.f32 %v1007, %v1011
    %v1013 = vlaneseq
    %v1014 = vshrl.u32 %v1013, 7
    %v1015 = vsub.s32 3, %v1014
    %v1016 = vrot.slane %v38, %v1015
    %v1017 = vadd.f32 %v1012, %v1016
    %v1018 = vlaneseq
    %v1019 = vshrl.u32 %v1018, 7
    %v1020 = vsub.s32 4, %v1019
    %v1021 = vrot.slane %v38, %v1020
    %1026 = vrot.lane.b32.xlu0 %v231, 96
    %v1027 = vpop.permute.xlu0 %1026
    %1028 = vrot.lane.b32.xlu0 %v232, 96
    %v1029 = vpop.permute.xlu0 %1028
    %1030 = vrot.lane.b32.xlu0 %v233, 96
    %v1031 = vpop.permute.xlu0 %1030
    %1032 = vrot.lane.b32.xlu0 %v234, 96
    %v1033 = vpop.permute.xlu0 %1032
    %v1039 = vsel %vm150, %v1017, 0
    %1041 = vmatprep.subr.mxu0 0.0
    %1042 = vmatpush1.msra.mxu0 %v1027
    %1043 = vmatprep.subr.mxu0 0.0
    %1044 = vmatpush1.msra.mxu0 %v1029
    %1045 = vmatprep.subr.mxu0 0.0
    %1046 = vmatpush1.msra.mxu0 %v1031
    %1047 = vmatprep.subr.mxu0 0.0
    %1048 = vmatpush1.msra.mxu0 %v1033
    %1049 = vmatprep.subr.mxu0 0.0
    %1050 = vmatpush1.msra.mxu0 0.0
    %1051 = vmatprep.subr.mxu0 0.0
    %1052 = vmatpush1.msra.mxu0 0.0
    %1053 = vmatprep.subr.mxu0 0.0
    %1054 = vmatpush1.msra.mxu0 0.0
    %1055 = vmatprep.subr.mxu0 0.0
    %1056 = vmatpush1.msra.mxu0 0.0
    %1057 = vmatprep.subr.mxu0 0.0
    %1058 = vmatpush1.msra.mxu0 0.0
    %1059 = vmatprep.subr.mxu0 0.0
    %1060 = vmatpush1.msra.mxu0 0.0
    %1061 = vmatprep.subr.mxu0 0.0
    %1062 = vmatpush1.msra.mxu0 0.0
    %1063 = vmatprep.subr.mxu0 0.0
    %1064 = vmatpush1.msra.mxu0 0.0
    %1065 = vmatprep.subr.mxu0 0.0
    %1066 = vmatpush1.msra.mxu0 0.0
    %1067 = vmatprep.subr.mxu0 0.0
    %1068 = vmatpush1.msra.mxu0 0.0
    %1069 = vmatprep.subr.mxu0 0.0
    %1070 = vmatpush1.msra.mxu0 0.0
    %1071 = vmatprep.subr.mxu0 0.0
    %1072 = vmatpush1.msra.mxu0 0.0
    %1073 = vmatprep.subr.mxu0 0.0
    %1074 = vmatpush1.msra.mxu0 0.0
    %1075 = vmatprep.subr.mxu0 0.0
    %1076 = vmatpush1.msra.mxu0 0.0
    %1077 = vmatprep.subr.mxu0 0.0
    %1078 = vmatpush1.msra.mxu0 0.0
    %1079 = vmatprep.subr.mxu0 0.0
    %1080 = vmatpush1.msra.mxu0 0.0
    %1081 = vmatprep.subr.mxu0 0.0
    %1082 = vmatpush1.msra.mxu0 0.0
    %1083 = vmatprep.subr.mxu0 0.0
    %1084 = vmatpush1.msra.mxu0 0.0
    %1085 = vmatprep.subr.mxu0 0.0
    %1086 = vmatpush1.msra.mxu0 0.0
    %1087 = vmatprep.subr.mxu0 0.0
    %1088 = vmatpush1.msra.mxu0 0.0
    %1089 = vmatprep.subr.mxu0 0.0
    %1090 = vmatpush1.msra.mxu0 0.0
    %1091 = vmatprep.subr.mxu0 0.0
    %1092 = vmatpush1.msra.mxu0 0.0
    %1093 = vmatprep.subr.mxu0 0.0
    %1094 = vmatpush1.msra.mxu0 0.0
    %1095 = vmatprep.subr.mxu0 0.0
    %1096 = vmatpush1.msra.mxu0 0.0
    %1097 = vmatprep.subr.mxu0 0.0
    %1098 = vmatpush1.msra.mxu0 0.0
    %1099 = vmatprep.subr.mxu0 0.0
    %1100 = vmatpush1.msra.mxu0 0.0
    %1101 = vmatprep.subr.mxu0 0.0
    %1102 = vmatpush1.msra.mxu0 0.0
    %1103 = vmatprep.subr.mxu0 0.0
    %1104 = vmatpush1.msra.mxu0 0.0
    %1105 = vmatprep.mubr.f32.mxu0 0.0
    %1106 = vmatmul.mubr.f32.gmra.mrb[0].mxu0 %v1039
    %v1107 = vpop.f32.mrb[0].mxu0
    %v1108 = vadd.f32 %v1021, %v1107
    %v1109 = vpop.f32.mrb[0].mxu0
    %1110 = vdwg.mxu0
    %v1111 = vmax.f32 %v1108, 0.0
    %v1112 = vld [vmem:[%s4] sm:$0xff]
    %v1113 = vld [vmem:[%s4 + $0x8] sm:$0xff]
    %v1114 = vld [vmem:[%s4 + $0x10] sm:$0xff]
    %v1115 = vld [vmem:[%s4 + $0x18] sm:$0xff]
    %v1116 = vld [vmem:[%s4 + $0x20] sm:$0xff]
    %v1117 = vld [vmem:[%s4 + $0x28] sm:$0xff]
    %v1118 = vld [vmem:[%s4 + $0x30] sm:$0xff]
    %v1119 = vld [vmem:[%s4 + $0x38] sm:$0xff]
    %v1120 = vlaneseq
    %v1121 = vshrl.u32 %v1120, 7
    %v1122 = vsub.s32 5, %v1121
    %v1123 = vrot.slane %v38, %v1122
    %vm1124 = vcmask 523264
    %v1126 = vsel %vm1124, %v1111, 0
    %1128 = vmatprep.subr.mxu0 0.0
    %1129 = vmatpush1.msra.mxu0 %v1112
    %1130 = vmatprep.subr.mxu0 0.0
    %1131 = vmatpush1.msra.mxu0 %v1113
    %1132 = vmatprep.subr.mxu0 0.0
    %1133 = vmatpush1.msra.mxu0 %v1114
    %1134 = vmatprep.subr.mxu0 0.0
    %1135 = vmatpush1.msra.mxu0 %v1115
    %1136 = vmatprep.subr.mxu0 0.0
    %1137 = vmatpush1.msra.mxu0 %v1116
    %1138 = vmatprep.subr.mxu0 0.0
    %1139 = vmatpush1.msra.mxu0 %v1117
    %1140 = vmatprep.subr.mxu0 0.0
    %1141 = vmatpush1.msra.mxu0 %v1118
    %1142 = vmatprep.subr.mxu0 0.0
    %1143 = vmatpush1.msra.mxu0 %v1119
    %1144 = vmatprep.subr.mxu0 0.0
    %1145 = vmatpush1.msra.mxu0 0.0
    %1146 = vmatprep.subr.mxu0 0.0
    %1147 = vmatpush1.msra.mxu0 0.0
    %1148 = vmatprep.subr.mxu0 0.0
    %1149 = vmatpush1.msra.mxu0 0.0
    %1150 = vmatprep.subr.mxu0 0.0
    %1151 = vmatpush1.msra.mxu0 0.0
    %1152 = vmatprep.subr.mxu0 0.0
    %1153 = vmatpush1.msra.mxu0 0.0
    %1154 = vmatprep.subr.mxu0 0.0
    %1155 = vmatpush1.msra.mxu0 0.0
    %1156 = vmatprep.subr.mxu0 0.0
    %1157 = vmatpush1.msra.mxu0 0.0
    %1158 = vmatprep.subr.mxu0 0.0
    %1159 = vmatpush1.msra.mxu0 0.0
    %1160 = vmatprep.subr.mxu0 0.0
    %1161 = vmatpush1.msra.mxu0 0.0
    %1162 = vmatprep.subr.mxu0 0.0
    %1163 = vmatpush1.msra.mxu0 0.0
    %1164 = vmatprep.subr.mxu0 0.0
    %1165 = vmatpush1.msra.mxu0 0.0
    %1166 = vmatprep.subr.mxu0 0.0
    %1167 = vmatpush1.msra.mxu0 0.0
    %1168 = vmatprep.subr.mxu0 0.0
    %1169 = vmatpush1.msra.mxu0 0.0
    %1170 = vmatprep.subr.mxu0 0.0
    %1171 = vmatpush1.msra.mxu0 0.0
    %1172 = vmatprep.subr.mxu0 0.0
    %1173 = vmatpush1.msra.mxu0 0.0
    %1174 = vmatprep.subr.mxu0 0.0
    %1175 = vmatpush1.msra.mxu0 0.0
    %1176 = vmatprep.subr.mxu0 0.0
    %1177 = vmatpush1.msra.mxu0 0.0
    %1178 = vmatprep.subr.mxu0 0.0
    %1179 = vmatpush1.msra.mxu0 0.0
    %1180 = vmatprep.subr.mxu0 0.0
    %1181 = vmatpush1.msra.mxu0 0.0
    %1182 = vmatprep.subr.mxu0 0.0
    %1183 = vmatpush1.msra.mxu0 0.0
    %1184 = vmatprep.subr.mxu0 0.0
    %1185 = vmatpush1.msra.mxu0 0.0
    %1186 = vmatprep.subr.mxu0 0.0
    %1187 = vmatpush1.msra.mxu0 0.0
    %1188 = vmatprep.subr.mxu0 0.0
    %1189 = vmatpush1.msra.mxu0 0.0
    %1190 = vmatprep.subr.mxu0 0.0
    %1191 = vmatpush1.msra.mxu0 0.0
    %1192 = vmatprep.mubr.f32.mxu0 0.0
    %1193 = vmatmul.mubr.f32.gmra.mrb[0].mxu0 %v1126
    %v1194 = vpop.f32.mrb[0].mxu0
    %v1195 = vadd.f32 %v1123, %v1194
    %v1196 = vpop.f32.mrb[0].mxu0
    %1197 = vdwg.mxu0
    %v1198 = vadd.f32 %v1017, %v1195
    %v1199 = vsel %vm150, %v1198, 0.0
    %1200 = vadd.xlane.f32.xlu0 %v1199
    %v1201 = vpop.xlane.xlu0 %1200
    %v1202 = vmul.f32 %v1201, %v997
    %v1203 = vsub.f32 %v1198, %v1202
    %v1204 = vmul.f32 %v1203, %v1203
    %v1205 = vsel %vm150, %v1204, 0.0
    %1206 = vadd.xlane.f32.xlu0 %v1205
    %v1207 = vpop.xlane.xlu0 %1206
    %v1208 = vmul.f32 %v1207, %v997
    %v1209 = vadd.f32 %v1208, 1e-05
    %v1210 = vrsqrt.pop %v1209
    %v1211 = vmul.f32 %v1203, %v1210
    %v1212 = vmul.f32 %v1211, %v1011
    %v1213 = vadd.f32 %v1212, %v1016
    %v1215 = vrot.slane %v1213, 2
    %v1217 = vadd.f32 %v1213, %v1215
    %v1218 = vrot.slane %v1213, 4
    %v1220 = vadd.f32 %v1217, %v1218
    %v1221 = vrot.slane %v1213, 6
    %v1223 = vadd.f32 %v1220, %v1221
    %v1224 = vmul.f32 %v1223, 0.25
    %vm1225 = vcmask 254976
    %1226 = vst.msk [vmem:[#allocation5] sm:$0x3] %vm1225, %v1224
    // Predicated region
    $region30: #{forward.1} parent=1 // pred_check
      _
    $region31: #{forward.1} parent=1 // pred_check_branch
      %1228 = sbr.rel (0) target = $region33
    $region32: #{forward.1} parent=1 // pred_region
      %s1230 = ssub.s32 32, 32
      %1231 = vsyncadd [#allocation4], %s1230
      %s1233 = sshll.u32 [#allocation5], 4
      %s1234 = int_to_ptr.vmem [resolvable:$true] %s1233
      %1236 = dma.vmem_to_hbm [thread:$0]  %s1234, 32, %s6, [#allocation4]
    $region33: #{forward.1} parent=1 // pred_fallthru
      _
    // Predicated region
    $region34: #{forward.1} parent=1 // pred_check
      _
    $region35: #{forward.1} parent=1 // pred_check_branch
      %1238 = sbr.rel (0) target = $region37
    $region36: #{forward.1} parent=1 // pred_region
      %1239 = dma.done [#allocation4], 32
    $region37: #{forward.1} parent=1 // pred_fallthru
      _
    %1240 = vsyncpa [#allocation3], 1
    %1241 = vsyncpa [#allocation4], 1

</llo_original>
